<compile_context>
chip_gen: v7x
topology: tpu7x:2x2x1
jax: 0.10.0
libtpu: 0.0.40
codegen_flags: <defaults>
</compile_context>

<pallas_src>
import math

import jax
import jax.numpy as jnp
from jax.experimental import pallas as pl
from jax.experimental.pallas import tpu as pltpu

# Scaled-down, TPU-friendly constants.
D_K = D_V = 32
N_HEADS = 4
D_MODEL = 128
D_FF = 256
LN_EPS = 1e-5          # nn.LayerNorm default
NEG_INF = -1.0e9       # masked_fill_ value in the reference


def encoder_layer_kernel(
    x_ref, mask_ref,
    wqkv_ref, bqkv_ref, wo_ref, bo_ref, ln_g_ref, ln_b_ref,
    w1_ref, b1_ref, w2_ref, b2_ref,
    out_ref, attn_ref,
    y_ln_ref,
):
    """Grid step (b, f): batch tile b, d_ff tile f.

    f == 0 : fused-QKV multi-head attention + residual + LayerNorm; per-head
             bf16 attn-prob stores; stash LN output in VMEM scratch; init the
             FFN accumulator (resident out block) with the fc2 bias.
    every f: accumulate one d_ff tile of fc2(gelu(fc1(y_ln))) into out_ref.
    """
    f = pl.program_id(1)
    Bt, S, D = x_ref.shape
    M = Bt * S

    # ---------------- attention + LayerNorm (first d_ff step only) ----------
    @pl.when(f == 0)
    def _attention():
        x = x_ref[...]                                      # (Bt, S, D) f32
        xf = x.reshape(M, D)
        xf_bf = xf.astype(jnp.bfloat16)

        # Fused Q/K/V projection: one full-lane-width MXU matmul.
        qkv = jnp.dot(xf_bf, wqkv_ref[...],
                      preferred_element_type=jnp.float32) + bqkv_ref[...]

        # Additive attention bias, computed once (mask is 0/1 int8, 1=masked).
        bias = mask_ref[...].astype(jnp.float32) * NEG_INF  # (Bt, S, S)

        scale = 1.0 / math.sqrt(D_K)
        hdk = N_HEADS * D_K

        ctx_heads = []
        for h in range(N_HEADS):                            # static unroll
            # Lane slices of the fused projection (XLU work, not MXU).
            q_h = qkv[:, h * D_K:(h + 1) * D_K]
            k_h = qkv[:, hdk + h * D_K: hdk + (h + 1) * D_K]
            v_h = qkv[:, 2 * hdk + h * D_V: 2 * hdk + (h + 1) * D_V]

            # Fold 1/sqrt(d_k) into q; bf16 inputs -> native bf16 MXU matmul.
            q_h = (q_h * scale).astype(jnp.bfloat16).reshape(Bt, S, D_K)
            k_h = k_h.astype(jnp.bfloat16).reshape(Bt, S, D_K)
            v_h = v_h.astype(jnp.bfloat16).reshape(Bt, S, D_V)

            scores = jnp.einsum("bqd,bkd->bqk", q_h, k_h,
                                preferred_element_type=jnp.float32) + bias
            scores = scores - jnp.max(scores, axis=-1, keepdims=True)
            e = jnp.exp(scores)
            inv = pl.reciprocal(jnp.sum(e, axis=-1, keepdims=True), approx=True)
            p = e * inv                                     # (Bt, S, S) f32

            # Per-head store, bf16 output: frees p immediately and lets the
            # writeback overlap the next head's compute.
            attn_ref[:, h, :, :] = p.astype(attn_ref.dtype)

            ctx_h = jnp.einsum("bqk,bkd->bqd", p.astype(jnp.bfloat16), v_h,
                               preferred_element_type=jnp.float32)
            ctx_heads.append(ctx_h.reshape(M, D_V).astype(jnp.bfloat16))

        # Head concat folded into ONE full-K output projection (K = H*d_v).
        ctx = jnp.concatenate(ctx_heads, axis=-1)           # (M, H*Dv) bf16
        proj = jnp.dot(ctx, wo_ref[...], preferred_element_type=jnp.float32)

        # Output-projection bias + residual + LayerNorm(d_model).
        y = proj + bo_ref[...] + xf
        mean = jnp.mean(y, axis=-1, keepdims=True)
        var = jnp.mean((y - mean) ** 2, axis=-1, keepdims=True)
        y_ln = (y - mean) * jax.lax.rsqrt(var + LN_EPS) * ln_g_ref[...] + ln_b_ref[...]

        # Stash LN output (bf16) for the remaining d_ff tiles of this batch
        # tile; initialise the resident FFN accumulator with the fc2 bias.
        y_ln_ref[...] = y_ln.astype(jnp.bfloat16)
        out_ref[...] = jnp.broadcast_to(b2_ref[...], (M, D)).reshape(Bt, S, D)

    # ---------------- FFN d_ff tile (every grid step) ------------------------
    # fc2(gelu(fc1(x))) decomposes as a sum over d_ff tiles; out_ref is the
    # resident f32 accumulator (constant block index along the f axis).
    y_bf = y_ln_ref[...]                                    # (M, D) bf16
    h1 = jnp.dot(y_bf, w1_ref[...],
                 preferred_element_type=jnp.float32) + b1_ref[...]
    # TODO(synk): F.gelu default is exact (erf); tanh approximation used here
    # (reviewer-approved) since exact-erf lowering is not guaranteed in Mosaic.
    h1 = jax.nn.gelu(h1, approximate=True)
    partial = jnp.dot(h1.astype(jnp.bfloat16), w2_ref[...],
                      preferred_element_type=jnp.float32)   # (M, D)
    out_ref[...] += partial.reshape(Bt, S, D)


def encoder_layer(x, mask, params, *, batch_tile=None, d_ff_tile=None,
                  attn_dtype=jnp.bfloat16):
    """x: (B, S, D_MODEL) f32; mask: (B, S, S) int8 0/1 (1 = masked key pos)."""
    B, S, D = x.shape
    assert D == D_MODEL
    if batch_tile is None:
        batch_tile = 1            # grid >= 2: pipelining + v7x 2-TC sharding
    assert B % batch_tile == 0
    if d_ff_tile is None:
        d_ff_tile = min(D_FF, 128)   # at real d_ff=3072 prefer 512-1024
    assert D_FF % d_ff_tile == 0 and d_ff_tile % 128 == 0
    grid = (B // batch_tile, D_FF // d_ff_tile)

    def resident(p):
        # Constant block index -> fetched once, stays resident across steps.
        # NOTE: at real sizes on v7x (64 MiB VMEM), single-buffer these
        # (pipeline_mode=pl.Buffered(1)) or stage via pl.ANY + one manual copy.
        nd = p.ndim
        return pl.BlockSpec(p.shape, lambda b, f, _nd=nd: (0,) * _nd)

    wqkv, bqkv, wo, bo, ln_g, ln_b, w1, b1, w2, b2 = params

    in_specs = [
        pl.BlockSpec((batch_tile, S, D), lambda b, f: (b, 0, 0)),    # x
        pl.BlockSpec((batch_tile, S, S), lambda b, f: (b, 0, 0)),    # mask int8
        resident(wqkv), resident(bqkv),
        resident(wo), resident(bo),
        resident(ln_g), resident(ln_b),
        pl.BlockSpec((D_MODEL, d_ff_tile), lambda b, f: (0, f)),     # w1 tile
        pl.BlockSpec((1, d_ff_tile), lambda b, f: (0, f)),           # b1 tile
        pl.BlockSpec((d_ff_tile, D_MODEL), lambda b, f: (f, 0)),     # w2 tile
        resident(b2),
    ]

    out_specs = [
        pl.BlockSpec((batch_tile, S, D), lambda b, f: (b, 0, 0)),             # enc_outputs
        pl.BlockSpec((batch_tile, N_HEADS, S, S), lambda b, f: (b, 0, 0, 0)), # attn
    ]
    out_shape = [
        jax.ShapeDtypeStruct((B, S, D), jnp.float32),
        jax.ShapeDtypeStruct((B, N_HEADS, S, S), attn_dtype),
    ]

    return pl.pallas_call(
        encoder_layer_kernel,
        grid=grid,
        in_specs=in_specs,
        out_specs=out_specs,
        out_shape=out_shape,
        scratch_shapes=[pltpu.VMEM((batch_tile * S, D_MODEL), jnp.bfloat16)],
        compiler_params=pltpu.CompilerParams(
            dimension_semantics=("parallel", "arbitrary"),
            vmem_limit_bytes=64 * 1024 * 1024,   # size to real-shape working set
        ),
    )(x, mask, *params)


def init_params(key):
    """Deterministic parameter init (synthetic; not a checkpoint load)."""
    ks = jax.random.split(key, 12)

    def lin(kw, kb, fan_in, fan_out):
        w = jax.random.normal(kw, (fan_in, fan_out), jnp.float32) * 0.02
        b = jax.random.normal(kb, (1, fan_out), jnp.float32) * 0.02
        return w, b

    wq, bq = lin(ks[0], ks[1], D_MODEL, N_HEADS * D_K)
    wk, bk = lin(ks[2], ks[3], D_MODEL, N_HEADS * D_K)
    wv, bv = lin(ks[4], ks[5], D_MODEL, N_HEADS * D_V)
    wo, bo = lin(ks[6], ks[7], N_HEADS * D_V, D_MODEL)
    ln_g = jnp.ones((1, D_MODEL), jnp.float32)   # fresh nn.LayerNorm: weight=1
    ln_b = jnp.zeros((1, D_MODEL), jnp.float32)  # bias=0
    w1, b1 = lin(ks[8], ks[9], D_MODEL, D_FF)
    w2, b2 = lin(ks[10], ks[11], D_FF, D_MODEL)

    # Fused QKV layout: columns = [Q heads | K heads | V heads], head-major
    # inside each section (matches torch .view(B, -1, n_heads, d_k)).
    wqkv = jnp.concatenate([wq, wk, wv], axis=1).astype(jnp.bfloat16)
    bqkv = jnp.concatenate([bq, bk, bv], axis=1)

    return [wqkv, bqkv,
            wo.astype(jnp.bfloat16), bo,
            ln_g, ln_b,
            w1.astype(jnp.bfloat16), b1,
            w2.astype(jnp.bfloat16), b2]


def encoder_layer_ref(x, mask, params):
    """Pure-JAX f32 reference with the PyTorch module's semantics."""
    wqkv, bqkv, wo, bo, ln_g, ln_b, w1, b1, w2, b2 = [
        p.astype(jnp.float32) for p in params]
    B, S, D = x.shape
    xf = x.reshape(B * S, D)
    qkv = xf @ wqkv + bqkv
    hdk = N_HEADS * D_K

    def heads(t, dh):
        return t.reshape(B, S, N_HEADS, dh).transpose(0, 2, 1, 3)

    q = heads(qkv[:, :hdk], D_K)
    k = heads(qkv[:, hdk:2 * hdk], D_K)
    v = heads(qkv[:, 2 * hdk:], D_V)
    scores = jnp.einsum("bhqd,bhkd->bhqk", q, k) / math.sqrt(D_K)
    scores = jnp.where(mask[:, None, :, :] != 0, NEG_INF, scores)
    attn = jax.nn.softmax(scores, axis=-1)
    ctx = jnp.einsum("bhqk,bhkd->bhqd", attn, v)
    ctx = ctx.transpose(0, 2, 1, 3).reshape(B * S, N_HEADS * D_V)
    y = ctx @ wo + bo + xf
    mean = jnp.mean(y, axis=-1, keepdims=True)
    var = jnp.mean((y - mean) ** 2, axis=-1, keepdims=True)
    y_ln = (y - mean) * jax.lax.rsqrt(var + LN_EPS) * ln_g + ln_b
    h1 = jax.nn.gelu(y_ln @ w1 + b1, approximate=False)
    out = h1 @ w2 + b2
    return out.reshape(B, S, D), attn


if __name__ == "__main__":
    B, S = 2, 8
    key = jax.random.PRNGKey(0)
    k_x, k_p = jax.random.split(key)

    x = jax.random.normal(k_x, (B, S, D_MODEL), jnp.float32)
    # Padding-style self-attention mask (int8): last 2 key positions masked.
    mask = jnp.zeros((B, S, S), jnp.int8).at[:, :, S - 2:].set(1)

    params = init_params(k_p)

    enc_out, attn = encoder_layer(x, mask, params, batch_tile=1, d_ff_tile=128)
    jax.block_until_ready((enc_out, attn))

    assert enc_out.shape == (B, S, D_MODEL)
    assert attn.shape == (B, N_HEADS, S, S)
    assert bool(jnp.all(jnp.isfinite(enc_out)))
    assert bool(jnp.all(jnp.isfinite(attn.astype(jnp.float32))))

    # Loose-tolerance check vs a pure-JAX f32 reference (kernel uses bf16
    # matmul inputs, approx reciprocal softmax, tanh GELU, bf16 attn output).
    ref_out, ref_attn = encoder_layer_ref(x, mask, params)
    err_out = float(jnp.max(jnp.abs(enc_out - ref_out)))
    err_attn = float(jnp.max(jnp.abs(attn.astype(jnp.float32) - ref_attn)))
    assert err_out < 5e-2, f"enc_out max err {err_out}"
    assert err_attn < 2e-2, f"attn max err {err_attn}"

    print("KERNEL_OK")
</pallas_src>

<mosaic_0001>
module attributes {stable_mosaic.version = 11 : i64} {
  func.func @encoder_layer_kernel(%arg0: i32, %arg1: i32, %arg2: memref<1x8x128xf32, #tpu.memory_space<vmem>>, %arg3: memref<1x8x8xi8, #tpu.memory_space<vmem>>, %arg4: memref<128x384xbf16, #tpu.memory_space<vmem>>, %arg5: memref<1x384xf32, #tpu.memory_space<vmem>>, %arg6: memref<128x128xbf16, #tpu.memory_space<vmem>>, %arg7: memref<1x128xf32, #tpu.memory_space<vmem>>, %arg8: memref<1x128xf32, #tpu.memory_space<vmem>>, %arg9: memref<1x128xf32, #tpu.memory_space<vmem>>, %arg10: memref<128x128xbf16, #tpu.memory_space<vmem>>, %arg11: memref<1x128xf32, #tpu.memory_space<vmem>>, %arg12: memref<128x128xbf16, #tpu.memory_space<vmem>>, %arg13: memref<1x128xf32, #tpu.memory_space<vmem>>, %arg14: memref<1x8x128xf32, #tpu.memory_space<vmem>>, %arg15: memref<1x4x8x8xbf16, #tpu.memory_space<vmem>>, %arg16: memref<8x128xbf16, #tpu.memory_space<vmem>>) attributes {dimension_semantics = [#tpu.dimension_semantics<parallel>, #tpu.dimension_semantics<arbitrary>], iteration_bounds = array<i64: 2, 2>, scalar_prefetch = 0 : i64, scratch_operands = 1 : i64, tpu.core_type = #tpu.core_type<tc>, window_params = [{transform_indices = @transform_0, window_bounds = array<i64: 1, 8, 128>}, {transform_indices = @transform_1, window_bounds = array<i64: 1, 8, 8>}, {pipeline_mode = #tpu.pipeline_mode<synchronous>, transform_indices = @transform_2, window_bounds = array<i64: 128, 384>}, {pipeline_mode = #tpu.pipeline_mode<synchronous>, transform_indices = @transform_3, window_bounds = array<i64: 1, 384>}, {pipeline_mode = #tpu.pipeline_mode<synchronous>, transform_indices = @transform_4, window_bounds = array<i64: 128, 128>}, {pipeline_mode = #tpu.pipeline_mode<synchronous>, transform_indices = @transform_5, window_bounds = array<i64: 1, 128>}, {pipeline_mode = #tpu.pipeline_mode<synchronous>, transform_indices = @transform_6, window_bounds = array<i64: 1, 128>}, {pipeline_mode = #tpu.pipeline_mode<synchronous>, transform_indices = @transform_7, window_bounds = array<i64: 1, 128>}, {transform_indices = @transform_8, window_bounds = array<i64: 128, 128>}, {transform_indices = @transform_9, window_bounds = array<i64: 1, 128>}, {transform_indices = @transform_10, window_bounds = array<i64: 128, 128>}, {pipeline_mode = #tpu.pipeline_mode<synchronous>, transform_indices = @transform_11, window_bounds = array<i64: 1, 128>}, {transform_indices = @transform_12, window_bounds = array<i64: 1, 8, 128>}, {transform_indices = @transform_13, window_bounds = array<i64: 1, 4, 8, 8>}]} {
    %c0_i32 = arith.constant 0 : i32
    %0 = arith.cmpi eq, %arg1, %c0_i32 : i32
    %1 = arith.extui %0 : i1 to i32
    %c0_i32_0 = arith.constant 0 : i32
    %2 = arith.cmpi ne, %1, %c0_i32_0 : i32
    scf.if %2 {
      %c0_19 = arith.constant 0 : index
      %c0_20 = arith.constant 0 : index
      %c0_21 = arith.constant 0 : index
      %29 = vector.load %arg2[%c0_19, %c0_20, %c0_21] : memref<1x8x128xf32, #tpu.memory_space<vmem>>, vector<1x8x128xf32>
      %30 = vector.shape_cast %29 : vector<1x8x128xf32> to vector<8x128xf32>
      %31 = arith.truncf %30 : vector<8x128xf32> to vector<8x128xbf16>
      %c0_22 = arith.constant 0 : index
      %c0_23 = arith.constant 0 : index
      %32 = vector.load %arg4[%c0_22, %c0_23] : memref<128x384xbf16, #tpu.memory_space<vmem>>, vector<128x384xbf16>
      %cst_24 = arith.constant dense<0.000000e+00> : vector<8x384xf32>
      %33 = tpu.matmul %31, %32, %cst_24 {dimension_numbers = #tpu.dot_dimension_numbers<[1], [0], [0], [1], [0, 0, 1, 1], [], []>} : vector<8x128xbf16>, vector<128x384xbf16>, vector<8x384xf32> -> vector<8x384xf32>
      %c0_25 = arith.constant 0 : index
      %c0_26 = arith.constant 0 : index
      %34 = vector.load %arg5[%c0_25, %c0_26] : memref<1x384xf32, #tpu.memory_space<vmem>>, vector<1x384xf32>
      %35 = vector.broadcast %34 : vector<1x384xf32> to vector<8x384xf32>
      %36 = arith.addf %33, %35 : vector<8x384xf32>
      %c0_27 = arith.constant 0 : index
      %c0_28 = arith.constant 0 : index
      %c0_29 = arith.constant 0 : index
      %37 = vector.load %arg3[%c0_27, %c0_28, %c0_29] : memref<1x8x8xi8, #tpu.memory_space<vmem>>, vector<1x8x8xi8>
      %38 = arith.sitofp %37 : vector<1x8x8xi8> to vector<1x8x8xf32>
      %cst_30 = arith.constant -1.000000e+09 : f32
      %39 = vector.broadcast %cst_30 : f32 to vector<1x8x8xf32>
      %40 = arith.mulf %38, %39 : vector<1x8x8xf32>
      %41 = vector.extract_strided_slice %36 {offsets = [0, 0], sizes = [8, 32], strides = [1, 1]} : vector<8x384xf32> to vector<8x32xf32>
      %42 = vector.extract_strided_slice %36 {offsets = [0, 128], sizes = [8, 32], strides = [1, 1]} : vector<8x384xf32> to vector<8x32xf32>
      %43 = vector.extract_strided_slice %36 {offsets = [0, 256], sizes = [8, 32], strides = [1, 1]} : vector<8x384xf32> to vector<8x32xf32>
      %cst_31 = arith.constant 0.176776692 : f32
      %44 = vector.broadcast %cst_31 : f32 to vector<8x32xf32>
      %45 = arith.mulf %41, %44 : vector<8x32xf32>
      %46 = arith.truncf %45 : vector<8x32xf32> to vector<8x32xbf16>
      %47 = vector.shape_cast %46 : vector<8x32xbf16> to vector<1x8x32xbf16>
      %48 = arith.truncf %42 : vector<8x32xf32> to vector<8x32xbf16>
      %49 = vector.shape_cast %48 : vector<8x32xbf16> to vector<1x8x32xbf16>
      %50 = arith.truncf %43 : vector<8x32xf32> to vector<8x32xbf16>
      %51 = vector.shape_cast %50 : vector<8x32xbf16> to vector<1x8x32xbf16>
      "tpu.trace_start"() <{level = 10 : i32, message = "bqd,bkd->bqk"}> : () -> ()
      %cst_32 = arith.constant dense<0.000000e+00> : vector<1x8x8xf32>
      %52 = tpu.matmul %47, %49, %cst_32 {dimension_numbers = #tpu.dot_dimension_numbers<[2], [2], [1], [1], [0, 0, 0, 1, 1, 1], [0], [0]>} : vector<1x8x32xbf16>, vector<1x8x32xbf16>, vector<1x8x8xf32> -> vector<1x8x8xf32>
      "tpu.trace_stop"() : () -> ()
      %53 = arith.addf %52, %40 : vector<1x8x8xf32>
      %cst_33 = arith.constant dense<0xFF800000> : vector<1x8xf32>
      %54 = vector.multi_reduction <maximumf>, %53, %cst_33 [2] : vector<1x8x8xf32> to vector<1x8xf32>
      %55 = vector.shape_cast %54 : vector<1x8xf32> to vector<1x8x1xf32>
      %56 = vector.broadcast %55 : vector<1x8x1xf32> to vector<1x8x8xf32>
      %57 = arith.subf %53, %56 : vector<1x8x8xf32>
      %58 = math.exp %57 : vector<1x8x8xf32>
      %cst_34 = arith.constant dense<0.000000e+00> : vector<1x8xf32>
      %59 = vector.multi_reduction <add>, %58, %cst_34 [2] : vector<1x8x8xf32> to vector<1x8xf32>
      %60 = vector.shape_cast %59 : vector<1x8xf32> to vector<1x8x1xf32>
      %61 = tpu.reciprocal %60 {approx = true} : vector<1x8x1xf32> -> vector<1x8x1xf32>
      %62 = vector.broadcast %61 : vector<1x8x1xf32> to vector<1x8x8xf32>
      %63 = arith.mulf %58, %62 : vector<1x8x8xf32>
      %64 = arith.truncf %63 : vector<1x8x8xf32> to vector<1x8x8xbf16>
      %c0_35 = arith.constant 0 : index
      %c0_36 = arith.constant 0 : index
      %c0_37 = arith.constant 0 : index
      %c0_38 = arith.constant 0 : index
      %65 = vector.load %arg15[%c0_35, %c0_36, %c0_37, %c0_38] : memref<1x4x8x8xbf16, #tpu.memory_space<vmem>>, vector<1x1x8x8xbf16>
      %66 = vector.shape_cast %65 : vector<1x1x8x8xbf16> to vector<1x8x8xbf16>
      %67 = vector.shape_cast %64 : vector<1x8x8xbf16> to vector<1x1x8x8xbf16>
      tpu.vector_store %arg15[%c0_35, %c0_36, %c0_37, %c0_38], %67 {strides = array<i32>} : memref<1x4x8x8xbf16, #tpu.memory_space<vmem>>, vector<1x1x8x8xbf16>,
      %68 = arith.truncf %63 : vector<1x8x8xf32> to vector<1x8x8xbf16>
      "tpu.trace_start"() <{level = 10 : i32, message = "bqk,bkd->bqd"}> : () -> ()
      %cst_39 = arith.constant dense<0.000000e+00> : vector<1x8x32xf32>
      %69 = tpu.matmul %68, %51, %cst_39 {dimension_numbers = #tpu.dot_dimension_numbers<[2], [1], [1], [2], [0, 0, 0, 1, 1, 2], [0], [0]>} : vector<1x8x8xbf16>, vector<1x8x32xbf16>, vector<1x8x32xf32> -> vector<1x8x32xf32>
      "tpu.trace_stop"() : () -> ()
      %70 = vector.shape_cast %69 : vector<1x8x32xf32> to vector<8x32xf32>
      %71 = arith.truncf %70 : vector<8x32xf32> to vector<8x32xbf16>
      %72 = vector.extract_strided_slice %36 {offsets = [0, 32], sizes = [8, 32], strides = [1, 1]} : vector<8x384xf32> to vector<8x32xf32>
      %73 = vector.extract_strided_slice %36 {offsets = [0, 160], sizes = [8, 32], strides = [1, 1]} : vector<8x384xf32> to vector<8x32xf32>
      %74 = vector.extract_strided_slice %36 {offsets = [0, 288], sizes = [8, 32], strides = [1, 1]} : vector<8x384xf32> to vector<8x32xf32>
      %cst_40 = arith.constant 0.176776692 : f32
      %75 = vector.broadcast %cst_40 : f32 to vector<8x32xf32>
      %76 = arith.mulf %72, %75 : vector<8x32xf32>
      %77 = arith.truncf %76 : vector<8x32xf32> to vector<8x32xbf16>
      %78 = vector.shape_cast %77 : vector<8x32xbf16> to vector<1x8x32xbf16>
      %79 = arith.truncf %73 : vector<8x32xf32> to vector<8x32xbf16>
      %80 = vector.shape_cast %79 : vector<8x32xbf16> to vector<1x8x32xbf16>
      %81 = arith.truncf %74 : vector<8x32xf32> to vector<8x32xbf16>
      %82 = vector.shape_cast %81 : vector<8x32xbf16> to vector<1x8x32xbf16>
      "tpu.trace_start"() <{level = 10 : i32, message = "bqd,bkd->bqk"}> : () -> ()
      %cst_41 = arith.constant dense<0.000000e+00> : vector<1x8x8xf32>
      %83 = tpu.matmul %78, %80, %cst_41 {dimension_numbers = #tpu.dot_dimension_numbers<[2], [2], [1], [1], [0, 0, 0, 1, 1, 1], [0], [0]>} : vector<1x8x32xbf16>, vector<1x8x32xbf16>, vector<1x8x8xf32> -> vector<1x8x8xf32>
      "tpu.trace_stop"() : () -> ()
      %84 = arith.addf %83, %40 : vector<1x8x8xf32>
      %cst_42 = arith.constant dense<0xFF800000> : vector<1x8xf32>
      %85 = vector.multi_reduction <maximumf>, %84, %cst_42 [2] : vector<1x8x8xf32> to vector<1x8xf32>
      %86 = vector.shape_cast %85 : vector<1x8xf32> to vector<1x8x1xf32>
      %87 = vector.broadcast %86 : vector<1x8x1xf32> to vector<1x8x8xf32>
      %88 = arith.subf %84, %87 : vector<1x8x8xf32>
      %89 = math.exp %88 : vector<1x8x8xf32>
      %cst_43 = arith.constant dense<0.000000e+00> : vector<1x8xf32>
      %90 = vector.multi_reduction <add>, %89, %cst_43 [2] : vector<1x8x8xf32> to vector<1x8xf32>
      %91 = vector.shape_cast %90 : vector<1x8xf32> to vector<1x8x1xf32>
      %92 = tpu.reciprocal %91 {approx = true} : vector<1x8x1xf32> -> vector<1x8x1xf32>
      %93 = vector.broadcast %92 : vector<1x8x1xf32> to vector<1x8x8xf32>
      %94 = arith.mulf %89, %93 : vector<1x8x8xf32>
      %95 = arith.truncf %94 : vector<1x8x8xf32> to vector<1x8x8xbf16>
      %c0_44 = arith.constant 0 : index
      %c1 = arith.constant 1 : index
      %c0_45 = arith.constant 0 : index
      %c0_46 = arith.constant 0 : index
      %96 = vector.load %arg15[%c0_44, %c1, %c0_45, %c0_46] : memref<1x4x8x8xbf16, #tpu.memory_space<vmem>>, vector<1x1x8x8xbf16>
      %97 = vector.shape_cast %96 : vector<1x1x8x8xbf16> to vector<1x8x8xbf16>
      %98 = vector.shape_cast %95 : vector<1x8x8xbf16> to vector<1x1x8x8xbf16>
      tpu.vector_store %arg15[%c0_44, %c1, %c0_45, %c0_46], %98 {strides = array<i32>} : memref<1x4x8x8xbf16, #tpu.memory_space<vmem>>, vector<1x1x8x8xbf16>,
      %99 = arith.truncf %94 : vector<1x8x8xf32> to vector<1x8x8xbf16>
      "tpu.trace_start"() <{level = 10 : i32, message = "bqk,bkd->bqd"}> : () -> ()
      %cst_47 = arith.constant dense<0.000000e+00> : vector<1x8x32xf32>
      %100 = tpu.matmul %99, %82, %cst_47 {dimension_numbers = #tpu.dot_dimension_numbers<[2], [1], [1], [2], [0, 0, 0, 1, 1, 2], [0], [0]>} : vector<1x8x8xbf16>, vector<1x8x32xbf16>, vector<1x8x32xf32> -> vector<1x8x32xf32>
      "tpu.trace_stop"() : () -> ()
      %101 = vector.shape_cast %100 : vector<1x8x32xf32> to vector<8x32xf32>
      %102 = arith.truncf %101 : vector<8x32xf32> to vector<8x32xbf16>
      %103 = vector.extract_strided_slice %36 {offsets = [0, 64], sizes = [8, 32], strides = [1, 1]} : vector<8x384xf32> to vector<8x32xf32>
      %104 = vector.extract_strided_slice %36 {offsets = [0, 192], sizes = [8, 32], strides = [1, 1]} : vector<8x384xf32> to vector<8x32xf32>
      %105 = vector.extract_strided_slice %36 {offsets = [0, 320], sizes = [8, 32], strides = [1, 1]} : vector<8x384xf32> to vector<8x32xf32>
      %cst_48 = arith.constant 0.176776692 : f32
      %106 = vector.broadcast %cst_48 : f32 to vector<8x32xf32>
      %107 = arith.mulf %103, %106 : vector<8x32xf32>
      %108 = arith.truncf %107 : vector<8x32xf32> to vector<8x32xbf16>
      %109 = vector.shape_cast %108 : vector<8x32xbf16> to vector<1x8x32xbf16>
      %110 = arith.truncf %104 : vector<8x32xf32> to vector<8x32xbf16>
      %111 = vector.shape_cast %110 : vector<8x32xbf16> to vector<1x8x32xbf16>
      %112 = arith.truncf %105 : vector<8x32xf32> to vector<8x32xbf16>
      %113 = vector.shape_cast %112 : vector<8x32xbf16> to vector<1x8x32xbf16>
      "tpu.trace_start"() <{level = 10 : i32, message = "bqd,bkd->bqk"}> : () -> ()
      %cst_49 = arith.constant dense<0.000000e+00> : vector<1x8x8xf32>
      %114 = tpu.matmul %109, %111, %cst_49 {dimension_numbers = #tpu.dot_dimension_numbers<[2], [2], [1], [1], [0, 0, 0, 1, 1, 1], [0], [0]>} : vector<1x8x32xbf16>, vector<1x8x32xbf16>, vector<1x8x8xf32> -> vector<1x8x8xf32>
      "tpu.trace_stop"() : () -> ()
      %115 = arith.addf %114, %40 : vector<1x8x8xf32>
      %cst_50 = arith.constant dense<0xFF800000> : vector<1x8xf32>
      %116 = vector.multi_reduction <maximumf>, %115, %cst_50 [2] : vector<1x8x8xf32> to vector<1x8xf32>
      %117 = vector.shape_cast %116 : vector<1x8xf32> to vector<1x8x1xf32>
      %118 = vector.broadcast %117 : vector<1x8x1xf32> to vector<1x8x8xf32>
      %119 = arith.subf %115, %118 : vector<1x8x8xf32>
      %120 = math.exp %119 : vector<1x8x8xf32>
      %cst_51 = arith.constant dense<0.000000e+00> : vector<1x8xf32>
      %121 = vector.multi_reduction <add>, %120, %cst_51 [2] : vector<1x8x8xf32> to vector<1x8xf32>
      %122 = vector.shape_cast %121 : vector<1x8xf32> to vector<1x8x1xf32>
      %123 = tpu.reciprocal %122 {approx = true} : vector<1x8x1xf32> -> vector<1x8x1xf32>
      %124 = vector.broadcast %123 : vector<1x8x1xf32> to vector<1x8x8xf32>
      %125 = arith.mulf %120, %124 : vector<1x8x8xf32>
      %126 = arith.truncf %125 : vector<1x8x8xf32> to vector<1x8x8xbf16>
      %c0_52 = arith.constant 0 : index
      %c2 = arith.constant 2 : index
      %c0_53 = arith.constant 0 : index
      %c0_54 = arith.constant 0 : index
      %127 = vector.load %arg15[%c0_52, %c2, %c0_53, %c0_54] : memref<1x4x8x8xbf16, #tpu.memory_space<vmem>>, vector<1x1x8x8xbf16>
      %128 = vector.shape_cast %127 : vector<1x1x8x8xbf16> to vector<1x8x8xbf16>
      %129 = vector.shape_cast %126 : vector<1x8x8xbf16> to vector<1x1x8x8xbf16>
      tpu.vector_store %arg15[%c0_52, %c2, %c0_53, %c0_54], %129 {strides = array<i32>} : memref<1x4x8x8xbf16, #tpu.memory_space<vmem>>, vector<1x1x8x8xbf16>,
      %130 = arith.truncf %125 : vector<1x8x8xf32> to vector<1x8x8xbf16>
      "tpu.trace_start"() <{level = 10 : i32, message = "bqk,bkd->bqd"}> : () -> ()
      %cst_55 = arith.constant dense<0.000000e+00> : vector<1x8x32xf32>
      %131 = tpu.matmul %130, %113, %cst_55 {dimension_numbers = #tpu.dot_dimension_numbers<[2], [1], [1], [2], [0, 0, 0, 1, 1, 2], [0], [0]>} : vector<1x8x8xbf16>, vector<1x8x32xbf16>, vector<1x8x32xf32> -> vector<1x8x32xf32>
      "tpu.trace_stop"() : () -> ()
      %132 = vector.shape_cast %131 : vector<1x8x32xf32> to vector<8x32xf32>
      %133 = arith.truncf %132 : vector<8x32xf32> to vector<8x32xbf16>
      %134 = vector.extract_strided_slice %36 {offsets = [0, 96], sizes = [8, 32], strides = [1, 1]} : vector<8x384xf32> to vector<8x32xf32>
      %135 = vector.extract_strided_slice %36 {offsets = [0, 224], sizes = [8, 32], strides = [1, 1]} : vector<8x384xf32> to vector<8x32xf32>
      %136 = vector.extract_strided_slice %36 {offsets = [0, 352], sizes = [8, 32], strides = [1, 1]} : vector<8x384xf32> to vector<8x32xf32>
      %cst_56 = arith.constant 0.176776692 : f32
      %137 = vector.broadcast %cst_56 : f32 to vector<8x32xf32>
      %138 = arith.mulf %134, %137 : vector<8x32xf32>
      %139 = arith.truncf %138 : vector<8x32xf32> to vector<8x32xbf16>
      %140 = vector.shape_cast %139 : vector<8x32xbf16> to vector<1x8x32xbf16>
      %141 = arith.truncf %135 : vector<8x32xf32> to vector<8x32xbf16>
      %142 = vector.shape_cast %141 : vector<8x32xbf16> to vector<1x8x32xbf16>
      %143 = arith.truncf %136 : vector<8x32xf32> to vector<8x32xbf16>
      %144 = vector.shape_cast %143 : vector<8x32xbf16> to vector<1x8x32xbf16>
      "tpu.trace_start"() <{level = 10 : i32, message = "bqd,bkd->bqk"}> : () -> ()
      %cst_57 = arith.constant dense<0.000000e+00> : vector<1x8x8xf32>
      %145 = tpu.matmul %140, %142, %cst_57 {dimension_numbers = #tpu.dot_dimension_numbers<[2], [2], [1], [1], [0, 0, 0, 1, 1, 1], [0], [0]>} : vector<1x8x32xbf16>, vector<1x8x32xbf16>, vector<1x8x8xf32> -> vector<1x8x8xf32>
      "tpu.trace_stop"() : () -> ()
      %146 = arith.addf %145, %40 : vector<1x8x8xf32>
      %cst_58 = arith.constant dense<0xFF800000> : vector<1x8xf32>
      %147 = vector.multi_reduction <maximumf>, %146, %cst_58 [2] : vector<1x8x8xf32> to vector<1x8xf32>
      %148 = vector.shape_cast %147 : vector<1x8xf32> to vector<1x8x1xf32>
      %149 = vector.broadcast %148 : vector<1x8x1xf32> to vector<1x8x8xf32>
      %150 = arith.subf %146, %149 : vector<1x8x8xf32>
      %151 = math.exp %150 : vector<1x8x8xf32>
      %cst_59 = arith.constant dense<0.000000e+00> : vector<1x8xf32>
      %152 = vector.multi_reduction <add>, %151, %cst_59 [2] : vector<1x8x8xf32> to vector<1x8xf32>
      %153 = vector.shape_cast %152 : vector<1x8xf32> to vector<1x8x1xf32>
      %154 = tpu.reciprocal %153 {approx = true} : vector<1x8x1xf32> -> vector<1x8x1xf32>
      %155 = vector.broadcast %154 : vector<1x8x1xf32> to vector<1x8x8xf32>
      %156 = arith.mulf %151, %155 : vector<1x8x8xf32>
      %157 = arith.truncf %156 : vector<1x8x8xf32> to vector<1x8x8xbf16>
      %c0_60 = arith.constant 0 : index
      %c3 = arith.constant 3 : index
      %c0_61 = arith.constant 0 : index
      %c0_62 = arith.constant 0 : index
      %158 = vector.load %arg15[%c0_60, %c3, %c0_61, %c0_62] : memref<1x4x8x8xbf16, #tpu.memory_space<vmem>>, vector<1x1x8x8xbf16>
      %159 = vector.shape_cast %158 : vector<1x1x8x8xbf16> to vector<1x8x8xbf16>
      %160 = vector.shape_cast %157 : vector<1x8x8xbf16> to vector<1x1x8x8xbf16>
      tpu.vector_store %arg15[%c0_60, %c3, %c0_61, %c0_62], %160 {strides = array<i32>} : memref<1x4x8x8xbf16, #tpu.memory_space<vmem>>, vector<1x1x8x8xbf16>,
      %161 = arith.truncf %156 : vector<1x8x8xf32> to vector<1x8x8xbf16>
      "tpu.trace_start"() <{level = 10 : i32, message = "bqk,bkd->bqd"}> : () -> ()
      %cst_63 = arith.constant dense<0.000000e+00> : vector<1x8x32xf32>
      %162 = tpu.matmul %161, %144, %cst_63 {dimension_numbers = #tpu.dot_dimension_numbers<[2], [1], [1], [2], [0, 0, 0, 1, 1, 2], [0], [0]>} : vector<1x8x8xbf16>, vector<1x8x32xbf16>, vector<1x8x32xf32> -> vector<1x8x32xf32>
      "tpu.trace_stop"() : () -> ()
      %163 = vector.shape_cast %162 : vector<1x8x32xf32> to vector<8x32xf32>
      %164 = arith.truncf %163 : vector<8x32xf32> to vector<8x32xbf16>
      %165 = tpu.concatenate %71, %102, %133, %164 in 1 : vector<8x32xbf16>, vector<8x32xbf16>, vector<8x32xbf16>, vector<8x32xbf16> -> vector<8x128xbf16>
      %c0_64 = arith.constant 0 : index
      %c0_65 = arith.constant 0 : index
      %166 = vector.load %arg6[%c0_64, %c0_65] : memref<128x128xbf16, #tpu.memory_space<vmem>>, vector<128x128xbf16>
      %cst_66 = arith.constant dense<0.000000e+00> : vector<8x128xf32>
      %167 = tpu.matmul %165, %166, %cst_66 {dimension_numbers = #tpu.dot_dimension_numbers<[1], [0], [0], [1], [0, 0, 1, 1], [], []>} : vector<8x128xbf16>, vector<128x128xbf16>, vector<8x128xf32> -> vector<8x128xf32>
      %c0_67 = arith.constant 0 : index
      %c0_68 = arith.constant 0 : index
      %168 = vector.load %arg7[%c0_67, %c0_68] : memref<1x128xf32, #tpu.memory_space<vmem>>, vector<1x128xf32>
      %169 = vector.broadcast %168 : vector<1x128xf32> to vector<8x128xf32>
      %170 = arith.addf %167, %169 : vector<8x128xf32>
      %171 = arith.addf %170, %30 : vector<8x128xf32>
      %cst_69 = arith.constant dense<0.000000e+00> : vector<8xf32>
      %172 = vector.multi_reduction <add>, %171, %cst_69 [1] : vector<8x128xf32> to vector<8xf32>
      %173 = vector.shape_cast %172 : vector<8xf32> to vector<8x1xf32>
      %cst_70 = arith.constant 1.280000e+02 : f32
      %174 = vector.broadcast %cst_70 : f32 to vector<8x1xf32>
      %175 = arith.divf %173, %174 : vector<8x1xf32>
      %176 = vector.broadcast %175 : vector<8x1xf32> to vector<8x128xf32>
      %177 = arith.subf %171, %176 : vector<8x128xf32>
      %178 = arith.mulf %177, %177 : vector<8x128xf32>
      %cst_71 = arith.constant dense<0.000000e+00> : vector<8xf32>
      %179 = vector.multi_reduction <add>, %178, %cst_71 [1] : vector<8x128xf32> to vector<8xf32>
      %180 = vector.shape_cast %179 : vector<8xf32> to vector<8x1xf32>
      %cst_72 = arith.constant 1.280000e+02 : f32
      %181 = vector.broadcast %cst_72 : f32 to vector<8x1xf32>
      %182 = arith.divf %180, %181 : vector<8x1xf32>
      %183 = vector.broadcast %175 : vector<8x1xf32> to vector<8x128xf32>
      %184 = arith.subf %171, %183 : vector<8x128xf32>
      %cst_73 = arith.constant 9.99999974E-6 : f32
      %185 = vector.broadcast %cst_73 : f32 to vector<8x1xf32>
      %186 = arith.addf %182, %185 : vector<8x1xf32>
      %187 = math.rsqrt %186 : vector<8x1xf32>
      %188 = vector.broadcast %187 : vector<8x1xf32> to vector<8x128xf32>
      %189 = arith.mulf %184, %188 : vector<8x128xf32>
      %c0_74 = arith.constant 0 : index
      %c0_75 = arith.constant 0 : index
      %190 = vector.load %arg8[%c0_74, %c0_75] : memref<1x128xf32, #tpu.memory_space<vmem>>, vector<1x128xf32>
      %191 = vector.broadcast %190 : vector<1x128xf32> to vector<8x128xf32>
      %192 = arith.mulf %189, %191 : vector<8x128xf32>
      %c0_76 = arith.constant 0 : index
      %c0_77 = arith.constant 0 : index
      %193 = vector.load %arg9[%c0_76, %c0_77] : memref<1x128xf32, #tpu.memory_space<vmem>>, vector<1x128xf32>
      %194 = vector.broadcast %193 : vector<1x128xf32> to vector<8x128xf32>
      %195 = arith.addf %192, %194 : vector<8x128xf32>
      %196 = arith.truncf %195 : vector<8x128xf32> to vector<8x128xbf16>
      %c0_78 = arith.constant 0 : index
      %c0_79 = arith.constant 0 : index
      %197 = vector.load %arg16[%c0_78, %c0_79] : memref<8x128xbf16, #tpu.memory_space<vmem>>, vector<8x128xbf16>
      tpu.vector_store %arg16[%c0_78, %c0_79], %196 {strides = array<i32>} : memref<8x128xbf16, #tpu.memory_space<vmem>>, vector<8x128xbf16>,
      %c0_80 = arith.constant 0 : index
      %c0_81 = arith.constant 0 : index
      %198 = vector.load %arg13[%c0_80, %c0_81] : memref<1x128xf32, #tpu.memory_space<vmem>>, vector<1x128xf32>
      %199 = vector.shape_cast %198 : vector<1x128xf32> to vector<1x128xf32>
      %200 = vector.broadcast %199 : vector<1x128xf32> to vector<8x128xf32>
      %201 = vector.shape_cast %200 : vector<8x128xf32> to vector<1x8x128xf32>
      %c0_82 = arith.constant 0 : index
      %c0_83 = arith.constant 0 : index
      %c0_84 = arith.constant 0 : index
      %202 = vector.load %arg14[%c0_82, %c0_83, %c0_84] : memref<1x8x128xf32, #tpu.memory_space<vmem>>, vector<1x8x128xf32>
      tpu.vector_store %arg14[%c0_82, %c0_83, %c0_84], %201 {strides = array<i32>} : memref<1x8x128xf32, #tpu.memory_space<vmem>>, vector<1x8x128xf32>,
    } else {
    }
    %c0 = arith.constant 0 : index
    %c0_1 = arith.constant 0 : index
    %3 = vector.load %arg16[%c0, %c0_1] : memref<8x128xbf16, #tpu.memory_space<vmem>>, vector<8x128xbf16>
    %c0_2 = arith.constant 0 : index
    %c0_3 = arith.constant 0 : index
    %4 = vector.load %arg10[%c0_2, %c0_3] : memref<128x128xbf16, #tpu.memory_space<vmem>>, vector<128x128xbf16>
    %cst = arith.constant dense<0.000000e+00> : vector<8x128xf32>
    %5 = tpu.matmul %3, %4, %cst {dimension_numbers = #tpu.dot_dimension_numbers<[1], [0], [0], [1], [0, 0, 1, 1], [], []>} : vector<8x128xbf16>, vector<128x128xbf16>, vector<8x128xf32> -> vector<8x128xf32>
    %c0_4 = arith.constant 0 : index
    %c0_5 = arith.constant 0 : index
    %6 = vector.load %arg11[%c0_4, %c0_5] : memref<1x128xf32, #tpu.memory_space<vmem>>, vector<1x128xf32>
    %7 = vector.broadcast %6 : vector<1x128xf32> to vector<8x128xf32>
    %8 = arith.addf %5, %7 : vector<8x128xf32>
    %9 = arith.mulf %8, %8 : vector<8x128xf32>
    %10 = arith.mulf %8, %9 : vector<8x128xf32>
    %cst_6 = arith.constant 4.471500e-02 : f32
    %11 = vector.broadcast %cst_6 : f32 to vector<8x128xf32>
    %12 = arith.mulf %11, %10 : vector<8x128xf32>
    %13 = arith.addf %8, %12 : vector<8x128xf32>
    %cst_7 = arith.constant 0.797884583 : f32
    %14 = vector.broadcast %cst_7 : f32 to vector<8x128xf32>
    %15 = arith.mulf %14, %13 : vector<8x128xf32>
    %16 = math.tanh %15 : vector<8x128xf32>
    %cst_8 = arith.constant 1.000000e+00 : f32
    %17 = vector.broadcast %cst_8 : f32 to vector<8x128xf32>
    %18 = arith.addf %17, %16 : vector<8x128xf32>
    %cst_9 = arith.constant 5.000000e-01 : f32
    %19 = vector.broadcast %cst_9 : f32 to vector<8x128xf32>
    %20 = arith.mulf %19, %18 : vector<8x128xf32>
    %21 = arith.mulf %8, %20 : vector<8x128xf32>
    %22 = arith.truncf %21 : vector<8x128xf32> to vector<8x128xbf16>
    %c0_10 = arith.constant 0 : index
    %c0_11 = arith.constant 0 : index
    %23 = vector.load %arg12[%c0_10, %c0_11] : memref<128x128xbf16, #tpu.memory_space<vmem>>, vector<128x128xbf16>
    %cst_12 = arith.constant dense<0.000000e+00> : vector<8x128xf32>
    %24 = tpu.matmul %22, %23, %cst_12 {dimension_numbers = #tpu.dot_dimension_numbers<[1], [0], [0], [1], [0, 0, 1, 1], [], []>} : vector<8x128xbf16>, vector<128x128xbf16>, vector<8x128xf32> -> vector<8x128xf32>
    %c0_13 = arith.constant 0 : index
    %c0_14 = arith.constant 0 : index
    %c0_15 = arith.constant 0 : index
    %25 = vector.load %arg14[%c0_13, %c0_14, %c0_15] : memref<1x8x128xf32, #tpu.memory_space<vmem>>, vector<1x8x128xf32>
    %26 = vector.shape_cast %24 : vector<8x128xf32> to vector<1x8x128xf32>
    %27 = arith.addf %25, %26 : vector<1x8x128xf32>
    %c0_16 = arith.constant 0 : index
    %c0_17 = arith.constant 0 : index
    %c0_18 = arith.constant 0 : index
    %28 = vector.load %arg14[%c0_16, %c0_17, %c0_18] : memref<1x8x128xf32, #tpu.memory_space<vmem>>, vector<1x8x128xf32>
    tpu.vector_store %arg14[%c0_16, %c0_17, %c0_18], %27 {strides = array<i32>} : memref<1x8x128xf32, #tpu.memory_space<vmem>>, vector<1x8x128xf32>,
    return
  }
  func.func @transform_0(%arg0: i32, %arg1: i32) -> (i32, i32, i32) {
    %c0_i32 = arith.constant 0 : i32
    %c0_i32_0 = arith.constant 0 : i32
    %c0_i32_1 = arith.constant 0 : i32
    return %arg0, %c0_i32, %c0_i32_0 : i32, i32, i32
  }
  func.func @transform_1(%arg0: i32, %arg1: i32) -> (i32, i32, i32) {
    %c0_i32 = arith.constant 0 : i32
    %c0_i32_0 = arith.constant 0 : i32
    %c0_i32_1 = arith.constant 0 : i32
    return %arg0, %c0_i32, %c0_i32_0 : i32, i32, i32
  }
  func.func @transform_2(%arg0: i32, %arg1: i32) -> (i32, i32) {
    %c0_i32 = arith.constant 0 : i32
    %c0_i32_0 = arith.constant 0 : i32
    %c0_i32_1 = arith.constant 0 : i32
    return %c0_i32, %c0_i32_0 : i32, i32
  }
  func.func @transform_3(%arg0: i32, %arg1: i32) -> (i32, i32) {
    %c0_i32 = arith.constant 0 : i32
    %c0_i32_0 = arith.constant 0 : i32
    %c0_i32_1 = arith.constant 0 : i32
    return %c0_i32, %c0_i32_0 : i32, i32
  }
  func.func @transform_4(%arg0: i32, %arg1: i32) -> (i32, i32) {
    %c0_i32 = arith.constant 0 : i32
    %c0_i32_0 = arith.constant 0 : i32
    %c0_i32_1 = arith.constant 0 : i32
    return %c0_i32, %c0_i32_0 : i32, i32
  }
  func.func @transform_5(%arg0: i32, %arg1: i32) -> (i32, i32) {
    %c0_i32 = arith.constant 0 : i32
    %c0_i32_0 = arith.constant 0 : i32
    %c0_i32_1 = arith.constant 0 : i32
    return %c0_i32, %c0_i32_0 : i32, i32
  }
  func.func @transform_6(%arg0: i32, %arg1: i32) -> (i32, i32) {
    %c0_i32 = arith.constant 0 : i32
    %c0_i32_0 = arith.constant 0 : i32
    %c0_i32_1 = arith.constant 0 : i32
    return %c0_i32, %c0_i32_0 : i32, i32
  }
  func.func @transform_7(%arg0: i32, %arg1: i32) -> (i32, i32) {
    %c0_i32 = arith.constant 0 : i32
    %c0_i32_0 = arith.constant 0 : i32
    %c0_i32_1 = arith.constant 0 : i32
    return %c0_i32, %c0_i32_0 : i32, i32
  }
  func.func @transform_8(%arg0: i32, %arg1: i32) -> (i32, i32) {
    %c0_i32 = arith.constant 0 : i32
    %c0_i32_0 = arith.constant 0 : i32
    return %c0_i32, %arg1 : i32, i32
  }
  func.func @transform_9(%arg0: i32, %arg1: i32) -> (i32, i32) {
    %c0_i32 = arith.constant 0 : i32
    %c0_i32_0 = arith.constant 0 : i32
    return %c0_i32, %arg1 : i32, i32
  }
  func.func @transform_10(%arg0: i32, %arg1: i32) -> (i32, i32) {
    %c0_i32 = arith.constant 0 : i32
    %c0_i32_0 = arith.constant 0 : i32
    return %arg1, %c0_i32 : i32, i32
  }
  func.func @transform_11(%arg0: i32, %arg1: i32) -> (i32, i32) {
    %c0_i32 = arith.constant 0 : i32
    %c0_i32_0 = arith.constant 0 : i32
    %c0_i32_1 = arith.constant 0 : i32
    return %c0_i32, %c0_i32_0 : i32, i32
  }
  func.func @transform_12(%arg0: i32, %arg1: i32) -> (i32, i32, i32) {
    %c0_i32 = arith.constant 0 : i32
    %c0_i32_0 = arith.constant 0 : i32
    %c0_i32_1 = arith.constant 0 : i32
    return %arg0, %c0_i32, %c0_i32_0 : i32, i32, i32
  }
  func.func @transform_13(%arg0: i32, %arg1: i32) -> (i32, i32, i32, i32) {
    %c0_i32 = arith.constant 0 : i32
    %c0_i32_0 = arith.constant 0 : i32
    %c0_i32_1 = arith.constant 0 : i32
    %c0_i32_2 = arith.constant 0 : i32
    return %arg0, %c0_i32, %c0_i32_0, %c0_i32_1 : i32, i32, i32, i32
  }
}

</mosaic_0001>

<llo_original>
// kernel: tpu_custom_call.1
$region0: #{tpu_custom_call.1}
  #allocation0 [shape = 'u32[]', space=smem, size = 0x4, offset = 0x4, fixed_abs, tag = 'smem constant byte address 0x4 - core index']
  #allocation1 [shape = 'u32[144,128]{1,0:T(1,128)}', space=vmem, size = 0x12000, scoped, tag = 'internal scratch']
  #allocation2 [shape = 'bf16[8,128]{1,0:T(8,128)(2,1)}', space=vmem, size = 0x800, scoped, tag = 'scratch operand']
  %s0 = inlined_call_operand.hbm [shape: f32[2,8,128], index: 0, kind: input, shape index: {}]
  %s1 = inlined_call_operand.hbm [shape: s8[2,8,8], index: 1, kind: input, shape index: {}]
  %s2 = inlined_call_operand.hbm [shape: bf16[128,384], index: 2, kind: input, shape index: {}]
  %s3 = inlined_call_operand.hbm [shape: f32[1,384], index: 3, kind: input, shape index: {}]
  %s4 = inlined_call_operand.hbm [shape: bf16[128,128], index: 4, kind: input, shape index: {}]
  %s5 = inlined_call_operand.hbm [shape: f32[1,128], index: 5, kind: input, shape index: {}]
  %s6 = inlined_call_operand.hbm [shape: f32[1,128], index: 6, kind: input, shape index: {}]
  %s7 = inlined_call_operand.hbm [shape: f32[1,128], index: 7, kind: input, shape index: {}]
  %s8 = inlined_call_operand.hbm [shape: bf16[128,256], index: 8, kind: input, shape index: {}]
  %s9 = inlined_call_operand.hbm [shape: f32[1,256], index: 9, kind: input, shape index: {}]
  %s10 = inlined_call_operand.hbm [shape: bf16[256,128], index: 10, kind: input, shape index: {}]
  %s11 = inlined_call_operand.hbm [shape: f32[1,128], index: 11, kind: input, shape index: {}]
  %s12 = inlined_call_operand.hbm [shape: f32[2,8,128], index: 12, kind: output, shape index: {0}]
  %s13 = inlined_call_operand.hbm [shape: bf16[2,4,8,8], index: 13, kind: output, shape index: {1}]
  %14 = xla_tuple %s12, %s13
  %s15 = sld [smem:[#allocation0]]
  $region141: #{tpu_custom_call.1} parent=0
    _
  %s17 = ssub.s32 1, %s15
  %s18 = scalar_select 0, %s17, %s15
  $region1: #{tpu_custom_call.1} parent=0
    #allocation3 [shape = 'u8[8192]{0}', space=vmem, size = 0x2000, scoped, tag = 'input window, operand 0']
    #allocation4 [shape = 's32[2]{0}', space=sflag, size = 0x8, scoped, tag = 'scoped memory for tpu_custom_call.1']
    #allocation5 [shape = 's32[2]{0}', space=sflag, size = 0x8, scoped, tag = 'scoped memory for tpu_custom_call.1']
    #allocation6 [shape = 'u8[2048]{0}', space=vmem, size = 0x800, scoped, tag = 'input window, operand 1']
    #allocation7 [shape = 's32[2]{0}', space=sflag, size = 0x8, scoped, tag = 'scoped memory for tpu_custom_call.1']
    #allocation8 [shape = 'u8[98304]{0}', space=vmem, size = 0x18000, scoped, tag = 'input window, operand 2, single buffered']
    #allocation9 [shape = 'u8[1536]{0}', space=vmem, size = 0x800, scoped, tag = 'input window, operand 3, single buffered']
    #allocation10 [shape = 's32[1]{0}', space=sflag, size = 0x4, scoped, tag = 'scoped memory for tpu_custom_call.1']
    #allocation11 [shape = 'u8[32768]{0}', space=vmem, size = 0x8000, scoped, tag = 'input window, operand 4, single buffered']
    #allocation12 [shape = 'u8[512]{0}', space=vmem, size = 0x400, scoped, tag = 'input window, operand 5, single buffered']
    #allocation13 [shape = 's32[1]{0}', space=sflag, size = 0x4, scoped, tag = 'scoped memory for tpu_custom_call.1']
    #allocation14 [shape = 'u8[512]{0}', space=vmem, size = 0x400, scoped, tag = 'input window, operand 6, single buffered']
    #allocation15 [shape = 'u8[512]{0}', space=vmem, size = 0x400, scoped, tag = 'input window, operand 7, single buffered']
    #allocation16 [shape = 's32[1]{0}', space=sflag, size = 0x4, scoped, tag = 'scoped memory for tpu_custom_call.1']
    #allocation17 [shape = 'u8[65536]{0}', space=vmem, size = 0x10000, scoped, tag = 'input window, operand 8']
    #allocation18 [shape = 'u8[1024]{0}', space=vmem, size = 0x400, scoped, tag = 'input window, operand 9']
    #allocation19 [shape = 'u8[65536]{0}', space=vmem, size = 0x10000, scoped, tag = 'input window, operand 10']
    #allocation20 [shape = 'u8[512]{0}', space=vmem, size = 0x400, scoped, tag = 'input window, operand 11, single buffered']
    #allocation21 [shape = 'u8[8192]{0}', space=vmem, size = 0x2000, scoped, tag = 'output window, operand 0']
    #allocation22 [shape = 'u8[16384]{0}', space=vmem, size = 0x4000, scoped, tag = 'output window, operand 1']
    #allocation23 [shape = 's32[2]{0}', space=sflag, size = 0x8, scoped, tag = 'scoped memory for tpu_custom_call.1']
    %19 = vsyncpa [#allocation4], 0
    %s20 = scalar_lea.sflag [#allocation4], 1
    %21 = vsyncpa %s20, 0
    %22 = vsyncpa [#allocation7], 0
    %s23 = scalar_lea.sflag [#allocation7], 1
    %24 = vsyncpa %s23, 0
    %25 = vsyncpa [#allocation10], 0
    %26 = vsyncpa [#allocation13], 0
    %27 = vsyncpa [#allocation16], 0
    %28 = vsyncpa [#allocation5], 0
    %s29 = scalar_lea.sflag [#allocation5], 1
    %30 = vsyncpa %s29, 0
    %31 = vsyncpa [#allocation23], 0
    %s32 = scalar_lea.sflag [#allocation23], 1
    %33 = vsyncpa %s32, 0
    loop: start=0, step=1, limit=6
    $region2: #{tpu_custom_call.1} parent=1 // loop_pre_header
      _
    $region3: #{tpu_custom_call.1} parent=1 // loop_header
      %s35 = sphi 0, %s39
      %p36 = scmp.ge.s32.totalorder %s35, 6
      %s42 = sphi 0, %s54
      %s43 = sphi 0, %s50
      %s44 = sphi 0, %s42
      %s45 = sphi 0, %s43
      %s46 = sphi 0, %s44
      %s47 = sphi 0, %s45
      %s57 = sphi 0, %s59
      %s60 = sphi 0, %s57
      %s61 = sphi 0, %s60
      %s77 = sphi 0, %s61
      %s83 = sphi 0, %s85
      %s86 = sphi 0, %s83
      %s87 = sphi 0, %s86
      %s103 = sphi 0, %s87
      %s107 = sphi 0, %s107
      %s109 = sphi 0, %s107
      %s110 = sphi 0, %s109
      %s124 = sphi 0, %s110
      %s128 = sphi 0, %s128
      %s130 = sphi 0, %s128
      %s131 = sphi 0, %s130
      %s145 = sphi 0, %s131
      %s149 = sphi 0, %s149
      %s151 = sphi 0, %s149
      %s152 = sphi 0, %s151
      %s166 = sphi 0, %s152
      %s170 = sphi 0, %s170
      %s172 = sphi 0, %s170
      %s173 = sphi 0, %s172
      %s187 = sphi 0, %s173
      %s191 = sphi 0, %s191
      %s193 = sphi 0, %s191
      %s194 = sphi 0, %s193
      %s208 = sphi 0, %s194
      %s212 = sphi 0, %s212
      %s214 = sphi 0, %s212
      %s215 = sphi 0, %s214
      %s229 = sphi 0, %s215
      %s235 = sphi 0, %s237
      %s238 = sphi 0, %s235
      %s239 = sphi 0, %s238
      %s255 = sphi 0, %s239
      %s261 = sphi 0, %s263
      %s264 = sphi 0, %s261
      %s265 = sphi 0, %s264
      %s281 = sphi 0, %s265
      %s287 = sphi 0, %s289
      %s290 = sphi 0, %s287
      %s291 = sphi 0, %s290
      %s307 = sphi 0, %s291
      %s311 = sphi 0, %s311
      %s313 = sphi 0, %s311
      %s314 = sphi 0, %s313
      %s328 = sphi 0, %s314
      %s334 = sphi 0, %s336
      %s337 = sphi 0, %s334
      %s338 = sphi 0, %s337
      %s354 = sphi 0, %s338
      %s360 = sphi 0, %s362
      %s363 = sphi 0, %s360
      %s364 = sphi 0, %s363
      %s380 = sphi 0, %s364
    $region4: #{tpu_custom_call.1} parent=1 // loop_header_branch
      %38 = sbr.rel (%p36) target = $region8
    $region5: #{tpu_custom_call.1} parent=1 // loop_body
      %s40 = ssub.s32 %s35, 1
      %s41 = ssub.s32 %s35, 2
      %s48 = sadd.s32 1, %s43
      %p49 = scmp.ge.s32.totalorder %s48, 2
      %s50 = scalar_select %p49, 0, %s48
      %s51 = sadd.s32 1, %s42
      %s52 = scalar_select %p49, %s51, %s42
      %p53 = scmp.ge.s32.totalorder %s52, 2
      %s54 = scalar_select %p53, 0, %s52
      %s55 = ssub.s32 %s42, %s54
      %p56 = scmp.eq.s32.totalorder %s55, 0
      %s58 = sadd.s32 %s57, 1
      %s59 = scalar_select %p56, %s57, %s58
      %p62 = pneg %p56
      %p63 = scmp.eq.s32.totalorder %s35, 3
      %p64 = por %p62, %p63
      %p65 = scmp.ne.s32.totalorder %s57, %s60
      %p66 = scmp.eq.s32.totalorder %s35, 0
      %p67 = por %p65, %p66
      %p68 = scmp.ne.s32.totalorder %s57, %s60
      %p69 = scmp.eq.s32.totalorder %s40, 3
      %p70 = por %p68, %p69
      %p71 = scmp.ne.s32.totalorder %s60, %s61
      %p72 = scmp.eq.s32.totalorder %s40, 0
      %p73 = por %p71, %p72
      %p74 = scmp.ne.s32.totalorder %s60, %s61
      %p75 = scmp.eq.s32.totalorder %s41, 3
      %p76 = por %p74, %p75
      %p78 = scmp.ne.s32.totalorder %s61, %s77
      %p79 = scmp.eq.s32.totalorder %s41, 0
      %p80 = por %p78, %p79
      %s81 = ssub.s32 %s42, %s54
      %p82 = scmp.eq.s32.totalorder %s81, 0
      %s84 = sadd.s32 %s83, 1
      %s85 = scalar_select %p82, %s83, %s84
      %p88 = pneg %p82
      %p89 = scmp.eq.s32.totalorder %s35, 3
      %p90 = por %p88, %p89
      %p91 = scmp.ne.s32.totalorder %s83, %s86
      %p92 = scmp.eq.s32.totalorder %s35, 0
      %p93 = por %p91, %p92
      %p94 = scmp.ne.s32.totalorder %s83, %s86
      %p95 = scmp.eq.s32.totalorder %s40, 3
      %p96 = por %p94, %p95
      %p97 = scmp.ne.s32.totalorder %s86, %s87
      %p98 = scmp.eq.s32.totalorder %s40, 0
      %p99 = por %p97, %p98
      %p100 = scmp.ne.s32.totalorder %s86, %s87
      %p101 = scmp.eq.s32.totalorder %s41, 3
      %p102 = por %p100, %p101
      %p104 = scmp.ne.s32.totalorder %s87, %s103
      %p105 = scmp.eq.s32.totalorder %s41, 0
      %p106 = por %p104, %p105
      %s108 = sadd.s32 %s107, 1
      %p111 = scmp.eq.s32.totalorder %s35, 3
      %p112 = scmp.ne.s32.totalorder %s107, %s109
      %p113 = scmp.eq.s32.totalorder %s35, 0
      %p114 = por %p112, %p113
      %p115 = scmp.ne.s32.totalorder %s107, %s109
      %p116 = scmp.eq.s32.totalorder %s40, 3
      %p117 = por %p115, %p116
      %p118 = scmp.ne.s32.totalorder %s109, %s110
      %p119 = scmp.eq.s32.totalorder %s40, 0
      %p120 = por %p118, %p119
      %p121 = scmp.ne.s32.totalorder %s109, %s110
      %p122 = scmp.eq.s32.totalorder %s41, 3
      %p123 = por %p121, %p122
      %p125 = scmp.ne.s32.totalorder %s110, %s124
      %p126 = scmp.eq.s32.totalorder %s41, 0
      %p127 = por %p125, %p126
      %s129 = sadd.s32 %s128, 1
      %p132 = scmp.eq.s32.totalorder %s35, 3
      %p133 = scmp.ne.s32.totalorder %s128, %s130
      %p134 = scmp.eq.s32.totalorder %s35, 0
      %p135 = por %p133, %p134
      %p136 = scmp.ne.s32.totalorder %s128, %s130
      %p137 = scmp.eq.s32.totalorder %s40, 3
      %p138 = por %p136, %p137
      %p139 = scmp.ne.s32.totalorder %s130, %s131
      %p140 = scmp.eq.s32.totalorder %s40, 0
      %p141 = por %p139, %p140
      %p142 = scmp.ne.s32.totalorder %s130, %s131
      %p143 = scmp.eq.s32.totalorder %s41, 3
      %p144 = por %p142, %p143
      %p146 = scmp.ne.s32.totalorder %s131, %s145
      %p147 = scmp.eq.s32.totalorder %s41, 0
      %p148 = por %p146, %p147
      %s150 = sadd.s32 %s149, 1
      %p153 = scmp.eq.s32.totalorder %s35, 3
      %p154 = scmp.ne.s32.totalorder %s149, %s151
      %p155 = scmp.eq.s32.totalorder %s35, 0
      %p156 = por %p154, %p155
      %p157 = scmp.ne.s32.totalorder %s149, %s151
      %p158 = scmp.eq.s32.totalorder %s40, 3
      %p159 = por %p157, %p158
      %p160 = scmp.ne.s32.totalorder %s151, %s152
      %p161 = scmp.eq.s32.totalorder %s40, 0
      %p162 = por %p160, %p161
      %p163 = scmp.ne.s32.totalorder %s151, %s152
      %p164 = scmp.eq.s32.totalorder %s41, 3
      %p165 = por %p163, %p164
      %p167 = scmp.ne.s32.totalorder %s152, %s166
      %p168 = scmp.eq.s32.totalorder %s41, 0
      %p169 = por %p167, %p168
      %s171 = sadd.s32 %s170, 1
      %p174 = scmp.eq.s32.totalorder %s35, 3
      %p175 = scmp.ne.s32.totalorder %s170, %s172
      %p176 = scmp.eq.s32.totalorder %s35, 0
      %p177 = por %p175, %p176
      %p178 = scmp.ne.s32.totalorder %s170, %s172
      %p179 = scmp.eq.s32.totalorder %s40, 3
      %p180 = por %p178, %p179
      %p181 = scmp.ne.s32.totalorder %s172, %s173
      %p182 = scmp.eq.s32.totalorder %s40, 0
      %p183 = por %p181, %p182
      %p184 = scmp.ne.s32.totalorder %s172, %s173
      %p185 = scmp.eq.s32.totalorder %s41, 3
      %p186 = por %p184, %p185
      %p188 = scmp.ne.s32.totalorder %s173, %s187
      %p189 = scmp.eq.s32.totalorder %s41, 0
      %p190 = por %p188, %p189
      %s192 = sadd.s32 %s191, 1
      %p195 = scmp.eq.s32.totalorder %s35, 3
      %p196 = scmp.ne.s32.totalorder %s191, %s193
      %p197 = scmp.eq.s32.totalorder %s35, 0
      %p198 = por %p196, %p197
      %p199 = scmp.ne.s32.totalorder %s191, %s193
      %p200 = scmp.eq.s32.totalorder %s40, 3
      %p201 = por %p199, %p200
      %p202 = scmp.ne.s32.totalorder %s193, %s194
      %p203 = scmp.eq.s32.totalorder %s40, 0
      %p204 = por %p202, %p203
      %p205 = scmp.ne.s32.totalorder %s193, %s194
      %p206 = scmp.eq.s32.totalorder %s41, 3
      %p207 = por %p205, %p206
      %p209 = scmp.ne.s32.totalorder %s194, %s208
      %p210 = scmp.eq.s32.totalorder %s41, 0
      %p211 = por %p209, %p210
      %s213 = sadd.s32 %s212, 1
      %p216 = scmp.eq.s32.totalorder %s35, 3
      %p217 = scmp.ne.s32.totalorder %s212, %s214
      %p218 = scmp.eq.s32.totalorder %s35, 0
      %p219 = por %p217, %p218
      %p220 = scmp.ne.s32.totalorder %s212, %s214
      %p221 = scmp.eq.s32.totalorder %s40, 3
      %p222 = por %p220, %p221
      %p223 = scmp.ne.s32.totalorder %s214, %s215
      %p224 = scmp.eq.s32.totalorder %s40, 0
      %p225 = por %p223, %p224
      %p226 = scmp.ne.s32.totalorder %s214, %s215
      %p227 = scmp.eq.s32.totalorder %s41, 3
      %p228 = por %p226, %p227
      %p230 = scmp.ne.s32.totalorder %s215, %s229
      %p231 = scmp.eq.s32.totalorder %s41, 0
      %p232 = por %p230, %p231
      %s233 = ssub.s32 %s43, %s50
      %p234 = scmp.eq.s32.totalorder %s233, 0
      %s236 = sadd.s32 %s235, 1
      %s237 = scalar_select %p234, %s235, %s236
      %p240 = pneg %p234
      %p241 = scmp.eq.s32.totalorder %s35, 3
      %p242 = por %p240, %p241
      %p243 = scmp.ne.s32.totalorder %s235, %s238
      %p244 = scmp.eq.s32.totalorder %s35, 0
      %p245 = por %p243, %p244
      %p246 = scmp.ne.s32.totalorder %s235, %s238
      %p247 = scmp.eq.s32.totalorder %s40, 3
      %p248 = por %p246, %p247
      %p249 = scmp.ne.s32.totalorder %s238, %s239
      %p250 = scmp.eq.s32.totalorder %s40, 0
      %p251 = por %p249, %p250
      %p252 = scmp.ne.s32.totalorder %s238, %s239
      %p253 = scmp.eq.s32.totalorder %s41, 3
      %p254 = por %p252, %p253
      %p256 = scmp.ne.s32.totalorder %s239, %s255
      %p257 = scmp.eq.s32.totalorder %s41, 0
      %p258 = por %p256, %p257
      %s259 = ssub.s32 %s43, %s50
      %p260 = scmp.eq.s32.totalorder %s259, 0
      %s262 = sadd.s32 %s261, 1
      %s263 = scalar_select %p260, %s261, %s262
      %p266 = pneg %p260
      %p267 = scmp.eq.s32.totalorder %s35, 3
      %p268 = por %p266, %p267
      %p269 = scmp.ne.s32.totalorder %s261, %s264
      %p270 = scmp.eq.s32.totalorder %s35, 0
      %p271 = por %p269, %p270
      %p272 = scmp.ne.s32.totalorder %s261, %s264
      %p273 = scmp.eq.s32.totalorder %s40, 3
      %p274 = por %p272, %p273
      %p275 = scmp.ne.s32.totalorder %s264, %s265
      %p276 = scmp.eq.s32.totalorder %s40, 0
      %p277 = por %p275, %p276
      %p278 = scmp.ne.s32.totalorder %s264, %s265
      %p279 = scmp.eq.s32.totalorder %s41, 3
      %p280 = por %p278, %p279
      %p282 = scmp.ne.s32.totalorder %s265, %s281
      %p283 = scmp.eq.s32.totalorder %s41, 0
      %p284 = por %p282, %p283
      %s285 = ssub.s32 %s43, %s50
      %p286 = scmp.eq.s32.totalorder %s285, 0
      %s288 = sadd.s32 %s287, 1
      %s289 = scalar_select %p286, %s287, %s288
      %p292 = pneg %p286
      %p293 = scmp.eq.s32.totalorder %s35, 3
      %p294 = por %p292, %p293
      %p295 = scmp.ne.s32.totalorder %s287, %s290
      %p296 = scmp.eq.s32.totalorder %s35, 0
      %p297 = por %p295, %p296
      %p298 = scmp.ne.s32.totalorder %s287, %s290
      %p299 = scmp.eq.s32.totalorder %s40, 3
      %p300 = por %p298, %p299
      %p301 = scmp.ne.s32.totalorder %s290, %s291
      %p302 = scmp.eq.s32.totalorder %s40, 0
      %p303 = por %p301, %p302
      %p304 = scmp.ne.s32.totalorder %s290, %s291
      %p305 = scmp.eq.s32.totalorder %s41, 3
      %p306 = por %p304, %p305
      %p308 = scmp.ne.s32.totalorder %s291, %s307
      %p309 = scmp.eq.s32.totalorder %s41, 0
      %p310 = por %p308, %p309
      %s312 = sadd.s32 %s311, 1
      %p315 = scmp.eq.s32.totalorder %s35, 3
      %p316 = scmp.ne.s32.totalorder %s311, %s313
      %p317 = scmp.eq.s32.totalorder %s35, 0
      %p318 = por %p316, %p317
      %p319 = scmp.ne.s32.totalorder %s311, %s313
      %p320 = scmp.eq.s32.totalorder %s40, 3
      %p321 = por %p319, %p320
      %p322 = scmp.ne.s32.totalorder %s313, %s314
      %p323 = scmp.eq.s32.totalorder %s40, 0
      %p324 = por %p322, %p323
      %p325 = scmp.ne.s32.totalorder %s313, %s314
      %p326 = scmp.eq.s32.totalorder %s41, 3
      %p327 = por %p325, %p326
      %p329 = scmp.ne.s32.totalorder %s314, %s328
      %p330 = scmp.eq.s32.totalorder %s41, 0
      %p331 = por %p329, %p330
      %s332 = ssub.s32 %s42, %s54
      %p333 = scmp.eq.s32.totalorder %s332, 0
      %s335 = sadd.s32 %s334, 1
      %s336 = scalar_select %p333, %s334, %s335
      %p339 = pneg %p333
      %p340 = scmp.eq.s32.totalorder %s35, 3
      %p341 = por %p339, %p340
      %p342 = scmp.ne.s32.totalorder %s334, %s337
      %p343 = scmp.eq.s32.totalorder %s35, 0
      %p344 = por %p342, %p343
      %p345 = scmp.ne.s32.totalorder %s334, %s337
      %p346 = scmp.eq.s32.totalorder %s40, 3
      %p347 = por %p345, %p346
      %p348 = scmp.ne.s32.totalorder %s337, %s338
      %p349 = scmp.eq.s32.totalorder %s40, 0
      %p350 = por %p348, %p349
      %p351 = scmp.ne.s32.totalorder %s337, %s338
      %p352 = scmp.eq.s32.totalorder %s41, 3
      %p353 = por %p351, %p352
      %p355 = scmp.ne.s32.totalorder %s338, %s354
      %p356 = scmp.eq.s32.totalorder %s41, 0
      %p357 = por %p355, %p356
      %s358 = ssub.s32 %s42, %s54
      %p359 = scmp.eq.s32.totalorder %s358, 0
      %s361 = sadd.s32 %s360, 1
      %s362 = scalar_select %p359, %s360, %s361
      %p365 = pneg %p359
      %p366 = scmp.eq.s32.totalorder %s35, 3
      %p367 = por %p365, %p366
      %p368 = scmp.ne.s32.totalorder %s360, %s363
      %p369 = scmp.eq.s32.totalorder %s35, 0
      %p370 = por %p368, %p369
      %p371 = scmp.ne.s32.totalorder %s360, %s363
      %p372 = scmp.eq.s32.totalorder %s40, 3
      %p373 = por %p371, %p372
      %p374 = scmp.ne.s32.totalorder %s363, %s364
      %p375 = scmp.eq.s32.totalorder %s40, 0
      %p376 = por %p374, %p375
      %p377 = scmp.ne.s32.totalorder %s363, %s364
      %p378 = scmp.eq.s32.totalorder %s41, 3
      %p379 = por %p377, %p378
      %p381 = scmp.ne.s32.totalorder %s364, %s380
      %p382 = scmp.eq.s32.totalorder %s41, 0
      %p383 = por %p381, %p382
      %p384 = scmp.le.s32.totalorder 1, %s35
      %p385 = scmp.lt.s32.totalorder %s35, 5
      %p386 = pnand %p384, %p385
      %p387 = pneg %p386
      // Predicated region
      $region9: #{tpu_custom_call.1} parent=5 // pred_check
        _
      $region10: #{tpu_custom_call.1} parent=5 // pred_check_branch
        %389 = sbr.rel (%p386) target = $region12
      $region11: #{tpu_custom_call.1} parent=5 // pred_region
        %s390 = ssub.s32 %s35, 1
        // Predicated region
        $region13: #{tpu_custom_call.1} parent=11 // pred_check
          %p391 = pneg %p120
        $region14: #{tpu_custom_call.1} parent=11 // pred_check_branch
          %393 = sbr.rel (%p391) target = $region16
        $region15: #{tpu_custom_call.1} parent=11 // pred_region
          %s395 = ssub.s32 3072, 3072
          %396 = vsyncadd [#allocation7], %s395
          %s397 = sshll.u32 [#allocation8], 4
          %s398 = int_to_ptr.vmem [resolvable:$true] %s397
          %403 = dma.hbm_to_vmem [thread:$0]  %s2, 3072, %s398, [#allocation7], 192, 192, 12
        $region16: #{tpu_custom_call.1} parent=11 // pred_fallthru
          _
        // Predicated region
        $region17: #{tpu_custom_call.1} parent=11 // pred_check
          %p404 = pneg %p141
        $region18: #{tpu_custom_call.1} parent=11 // pred_check_branch
          %406 = sbr.rel (%p404) target = $region20
        $region19: #{tpu_custom_call.1} parent=11 // pred_region
          %s408 = ssub.s32 48, 48
          %409 = vsyncadd [#allocation10], %s408
          %s411 = sshll.u32 [#allocation9], 4
          %s412 = int_to_ptr.vmem [resolvable:$true] %s411
          %414 = dma.hbm_to_vmem [thread:$0]  %s3, 48, %s412, [#allocation10]
        $region20: #{tpu_custom_call.1} parent=11 // pred_fallthru
          _
        // Predicated region
        $region21: #{tpu_custom_call.1} parent=11 // pred_check
          %p415 = pneg %p162
        $region22: #{tpu_custom_call.1} parent=11 // pred_check_branch
          %417 = sbr.rel (%p415) target = $region24
        $region23: #{tpu_custom_call.1} parent=11 // pred_region
          %s419 = ssub.s32 1024, 1024
          %420 = vsyncadd [#allocation10], %s419
          %s421 = sshll.u32 [#allocation11], 4
          %s422 = int_to_ptr.vmem [resolvable:$true] %s421
          %427 = dma.hbm_to_vmem [thread:$0]  %s4, 1024, %s422, [#allocation10], 64, 64, 4
        $region24: #{tpu_custom_call.1} parent=11 // pred_fallthru
          _
        // Predicated region
        $region25: #{tpu_custom_call.1} parent=11 // pred_check
          %p428 = pneg %p183
        $region26: #{tpu_custom_call.1} parent=11 // pred_check_branch
          %430 = sbr.rel (%p428) target = $region28
        $region27: #{tpu_custom_call.1} parent=11 // pred_region
          %s432 = ssub.s32 16, 16
          %433 = vsyncadd [#allocation13], %s432
          %s435 = sshll.u32 [#allocation12], 4
          %s436 = int_to_ptr.vmem [resolvable:$true] %s435
          %438 = dma.hbm_to_vmem [thread:$0]  %s5, 16, %s436, [#allocation13]
        $region28: #{tpu_custom_call.1} parent=11 // pred_fallthru
          _
        // Predicated region
        $region29: #{tpu_custom_call.1} parent=11 // pred_check
          %p439 = pneg %p204
        $region30: #{tpu_custom_call.1} parent=11 // pred_check_branch
          %441 = sbr.rel (%p439) target = $region32
        $region31: #{tpu_custom_call.1} parent=11 // pred_region
          %s443 = ssub.s32 16, 16
          %444 = vsyncadd [#allocation13], %s443
          %s446 = sshll.u32 [#allocation14], 4
          %s447 = int_to_ptr.vmem [resolvable:$true] %s446
          %449 = dma.hbm_to_vmem [thread:$0]  %s6, 16, %s447, [#allocation13]
        $region32: #{tpu_custom_call.1} parent=11 // pred_fallthru
          _
        // Predicated region
        $region33: #{tpu_custom_call.1} parent=11 // pred_check
          %p450 = pneg %p225
        $region34: #{tpu_custom_call.1} parent=11 // pred_check_branch
          %452 = sbr.rel (%p450) target = $region36
        $region35: #{tpu_custom_call.1} parent=11 // pred_region
          %s454 = ssub.s32 16, 16
          %455 = vsyncadd [#allocation16], %s454
          %s457 = sshll.u32 [#allocation15], 4
          %s458 = int_to_ptr.vmem [resolvable:$true] %s457
          %460 = dma.hbm_to_vmem [thread:$0]  %s7, 16, %s458, [#allocation16]
        $region36: #{tpu_custom_call.1} parent=11 // pred_fallthru
          _
        // Predicated region
        $region37: #{tpu_custom_call.1} parent=11 // pred_check
          %p461 = pneg %p324
        $region38: #{tpu_custom_call.1} parent=11 // pred_check_branch
          %463 = sbr.rel (%p461) target = $region40
        $region39: #{tpu_custom_call.1} parent=11 // pred_region
          %s465 = ssub.s32 16, 16
          %466 = vsyncadd [#allocation7], %s465
          %s468 = sshll.u32 [#allocation20], 4
          %s469 = int_to_ptr.vmem [resolvable:$true] %s468
          %471 = dma.hbm_to_vmem [thread:$0]  %s11, 16, %s469, [#allocation7]
        $region40: #{tpu_custom_call.1} parent=11 // pred_fallthru
          _
      $region12: #{tpu_custom_call.1} parent=5 // pred_fallthru
        _
      %p472 = scmp.lt.s32.totalorder %s35, 4
      // Predicated region
      $region41: #{tpu_custom_call.1} parent=5 // pred_check
        %p473 = pneg %p472
      $region42: #{tpu_custom_call.1} parent=5 // pred_check_branch
        %475 = sbr.rel (%p473) target = $region44
      $region43: #{tpu_custom_call.1} parent=5 // pred_region
        // Predicated region
        $region45: #{tpu_custom_call.1} parent=43 // pred_check
          %p476 = pneg %p67
        $region46: #{tpu_custom_call.1} parent=43 // pred_check_branch
          %478 = sbr.rel (%p476) target = $region48
        $region47: #{tpu_custom_call.1} parent=43 // pred_region
          %s479 = sand.u32 %s35, 1
          %s480 = scalar_lea.sflag [#allocation4], %s479
          %s481 = sand.u32 %s57, 1
          %s482 = smul.addr %s481, 8
          %s483 = scalar_lea.vmem [#allocation3], %s482
          %s485 = ssub.s32 128, 128
          %486 = vsyncadd %s480, %s485
          %s487 = smul.addr %s42, 128
          %s488 = scalar_lea.hbm %s0, %s487
          %s490 = sshll.u32 %s483, 4
          %s491 = int_to_ptr.vmem [resolvable:$true] %s490
          %493 = dma.hbm_to_vmem [thread:$0]  %s488, 128, %s491, %s480
        $region48: #{tpu_custom_call.1} parent=43 // pred_fallthru
          _
        // Predicated region
        $region49: #{tpu_custom_call.1} parent=43 // pred_check
          %p494 = pneg %p93
        $region50: #{tpu_custom_call.1} parent=43 // pred_check_branch
          %496 = sbr.rel (%p494) target = $region52
        $region51: #{tpu_custom_call.1} parent=43 // pred_region
          %s497 = sand.u32 %s35, 1
          %s498 = scalar_lea.sflag [#allocation7], %s497
          %s499 = sand.u32 %s83, 1
          %s500 = smul.addr %s499, 2
          %s501 = scalar_lea.vmem [#allocation6], %s500
          %s503 = ssub.s32 32, 32
          %504 = vsyncadd %s498, %s503
          %s505 = smul.addr %s42, 32
          %s506 = scalar_lea.hbm %s1, %s505
          %s508 = sshll.u32 %s501, 4
          %s509 = int_to_ptr.vmem [resolvable:$true] %s508
          %511 = dma.hbm_to_vmem [thread:$0]  %s506, 32, %s509, %s498
        $region52: #{tpu_custom_call.1} parent=43 // pred_fallthru
          _
        // Predicated region
        $region53: #{tpu_custom_call.1} parent=43 // pred_check
          %p512 = pneg %p245
        $region54: #{tpu_custom_call.1} parent=43 // pred_check_branch
          %514 = sbr.rel (%p512) target = $region56
        $region55: #{tpu_custom_call.1} parent=43 // pred_region
          %s515 = sand.u32 %s35, 1
          %s516 = scalar_lea.sflag [#allocation4], %s515
          %s517 = sand.u32 %s235, 1
          %s518 = smul.addr %s517, 64
          %s519 = scalar_lea.vmem [#allocation17], %s518
          %s521 = ssub.s32 1024, 1024
          %522 = vsyncadd %s516, %s521
          %s523 = smul.addr %s43, 64
          %s524 = scalar_lea.hbm %s8, %s523
          %s525 = sshll.u32 %s519, 4
          %s526 = int_to_ptr.vmem [resolvable:$true] %s525
          %531 = dma.hbm_to_vmem [thread:$0]  %s524, 1024, %s526, %s516, 128, 64, 4
        $region56: #{tpu_custom_call.1} parent=43 // pred_fallthru
          _
        // Predicated region
        $region57: #{tpu_custom_call.1} parent=43 // pred_check
          %p532 = pneg %p271
        $region58: #{tpu_custom_call.1} parent=43 // pred_check_branch
          %534 = sbr.rel (%p532) target = $region60
        $region59: #{tpu_custom_call.1} parent=43 // pred_region
          %s535 = sand.u32 %s35, 1
          %s536 = scalar_lea.sflag [#allocation7], %s535
          %s537 = sand.u32 %s261, 1
          %s538 = scalar_lea.vmem [#allocation18], %s537
          %s540 = ssub.s32 16, 16
          %541 = vsyncadd %s536, %s540
          %s542 = smul.addr %s43, 16
          %s543 = scalar_lea.hbm %s9, %s542
          %s545 = sshll.u32 %s538, 4
          %s546 = int_to_ptr.vmem [resolvable:$true] %s545
          %548 = dma.hbm_to_vmem [thread:$0]  %s543, 16, %s546, %s536
        $region60: #{tpu_custom_call.1} parent=43 // pred_fallthru
          _
        // Predicated region
        $region61: #{tpu_custom_call.1} parent=43 // pred_check
          %p549 = pneg %p297
        $region62: #{tpu_custom_call.1} parent=43 // pred_check_branch
          %551 = sbr.rel (%p549) target = $region64
        $region63: #{tpu_custom_call.1} parent=43 // pred_region
          %s552 = sand.u32 %s35, 1
          %s553 = scalar_lea.sflag [#allocation4], %s552
          %s554 = sand.u32 %s287, 1
          %s555 = smul.addr %s554, 64
          %s556 = scalar_lea.vmem [#allocation19], %s555
          %s557 = smul.u32 16, %s43
          %s559 = ssub.s32 1024, 1024
          %560 = vsyncadd %s553, %s559
          %s561 = smul.addr %s557, 64
          %s562 = scalar_lea.hbm %s10, %s561
          %s563 = sshll.u32 %s556, 4
          %s564 = int_to_ptr.vmem [resolvable:$true] %s563
          %569 = dma.hbm_to_vmem [thread:$0]  %s562, 1024, %s564, %s553, 64, 64, 4
        $region64: #{tpu_custom_call.1} parent=43 // pred_fallthru
          _
      $region44: #{tpu_custom_call.1} parent=5 // pred_fallthru
        _
      %p570 = scmp.le.s32.totalorder 1, %s35
      %p571 = scmp.lt.s32.totalorder %s35, 5
      %p572 = pnand %p570, %p571
      %p573 = pneg %p572
      // Predicated region
      $region65: #{tpu_custom_call.1} parent=5 // pred_check
        _
      $region66: #{tpu_custom_call.1} parent=5 // pred_check_branch
        %575 = sbr.rel (%p572) target = $region68
      $region67: #{tpu_custom_call.1} parent=5 // pred_region
        %s576 = ssub.s32 %s35, 1
        %s577 = sand.u32 %s40, 1
        %s578 = scalar_lea.sflag [#allocation4], %s577
        %s579 = sand.u32 %s60, 1
        %s580 = smul.addr %s579, 8
        %s581 = scalar_lea.vmem [#allocation3], %s580
        // Predicated region
        $region69: #{tpu_custom_call.1} parent=67 // pred_check
          %p582 = pneg %p73
        $region70: #{tpu_custom_call.1} parent=67 // pred_check_branch
          %584 = sbr.rel (%p582) target = $region72
        $region71: #{tpu_custom_call.1} parent=67 // pred_region
          %585 = dma.done %s578, 128
        $region72: #{tpu_custom_call.1} parent=67 // pred_fallthru
          _
        %s586 = sand.u32 %s40, 1
        %s587 = scalar_lea.sflag [#allocation7], %s586
        %s588 = sand.u32 %s86, 1
        %s589 = smul.addr %s588, 2
        %s590 = scalar_lea.vmem [#allocation6], %s589
        // Predicated region
        $region73: #{tpu_custom_call.1} parent=67 // pred_check
          %p591 = pneg %p99
        $region74: #{tpu_custom_call.1} parent=67 // pred_check_branch
          %593 = sbr.rel (%p591) target = $region76
        $region75: #{tpu_custom_call.1} parent=67 // pred_region
          %594 = dma.done %s587, 32
        $region76: #{tpu_custom_call.1} parent=67 // pred_fallthru
          _
        // Predicated region
        $region77: #{tpu_custom_call.1} parent=67 // pred_check
          %p595 = pneg %p120
        $region78: #{tpu_custom_call.1} parent=67 // pred_check_branch
          %597 = sbr.rel (%p595) target = $region80
        $region79: #{tpu_custom_call.1} parent=67 // pred_region
          %598 = dma.done [#allocation7], 3072
        $region80: #{tpu_custom_call.1} parent=67 // pred_fallthru
          _
        // Predicated region
        $region81: #{tpu_custom_call.1} parent=67 // pred_check
          %p599 = pneg %p141
        $region82: #{tpu_custom_call.1} parent=67 // pred_check_branch
          %601 = sbr.rel (%p599) target = $region84
        $region83: #{tpu_custom_call.1} parent=67 // pred_region
          %602 = dma.done [#allocation10], 48
        $region84: #{tpu_custom_call.1} parent=67 // pred_fallthru
          _
        // Predicated region
        $region85: #{tpu_custom_call.1} parent=67 // pred_check
          %p603 = pneg %p162
        $region86: #{tpu_custom_call.1} parent=67 // pred_check_branch
          %605 = sbr.rel (%p603) target = $region88
        $region87: #{tpu_custom_call.1} parent=67 // pred_region
          %606 = dma.done [#allocation10], 1024
        $region88: #{tpu_custom_call.1} parent=67 // pred_fallthru
          _
        // Predicated region
        $region89: #{tpu_custom_call.1} parent=67 // pred_check
          %p607 = pneg %p183
        $region90: #{tpu_custom_call.1} parent=67 // pred_check_branch
          %609 = sbr.rel (%p607) target = $region92
        $region91: #{tpu_custom_call.1} parent=67 // pred_region
          %610 = dma.done [#allocation13], 16
        $region92: #{tpu_custom_call.1} parent=67 // pred_fallthru
          _
        // Predicated region
        $region93: #{tpu_custom_call.1} parent=67 // pred_check
          %p611 = pneg %p204
        $region94: #{tpu_custom_call.1} parent=67 // pred_check_branch
          %613 = sbr.rel (%p611) target = $region96
        $region95: #{tpu_custom_call.1} parent=67 // pred_region
          %614 = dma.done [#allocation13], 16
        $region96: #{tpu_custom_call.1} parent=67 // pred_fallthru
          _
        // Predicated region
        $region97: #{tpu_custom_call.1} parent=67 // pred_check
          %p615 = pneg %p225
        $region98: #{tpu_custom_call.1} parent=67 // pred_check_branch
          %617 = sbr.rel (%p615) target = $region100
        $region99: #{tpu_custom_call.1} parent=67 // pred_region
          %618 = dma.done [#allocation16], 16
        $region100: #{tpu_custom_call.1} parent=67 // pred_fallthru
          _
        %s619 = sand.u32 %s40, 1
        %s620 = scalar_lea.sflag [#allocation4], %s619
        %s621 = sand.u32 %s238, 1
        %s622 = smul.addr %s621, 64
        %s623 = scalar_lea.vmem [#allocation17], %s622
        // Predicated region
        $region101: #{tpu_custom_call.1} parent=67 // pred_check
          %p624 = pneg %p251
        $region102: #{tpu_custom_call.1} parent=67 // pred_check_branch
          %626 = sbr.rel (%p624) target = $region104
        $region103: #{tpu_custom_call.1} parent=67 // pred_region
          %627 = dma.done %s620, 1024
        $region104: #{tpu_custom_call.1} parent=67 // pred_fallthru
          _
        %s628 = sand.u32 %s40, 1
        %s629 = scalar_lea.sflag [#allocation7], %s628
        %s630 = sand.u32 %s264, 1
        %s631 = scalar_lea.vmem [#allocation18], %s630
        // Predicated region
        $region105: #{tpu_custom_call.1} parent=67 // pred_check
          %p632 = pneg %p277
        $region106: #{tpu_custom_call.1} parent=67 // pred_check_branch
          %634 = sbr.rel (%p632) target = $region108
        $region107: #{tpu_custom_call.1} parent=67 // pred_region
          %635 = dma.done %s629, 16
        $region108: #{tpu_custom_call.1} parent=67 // pred_fallthru
          _
        %s636 = sand.u32 %s40, 1
        %s637 = scalar_lea.sflag [#allocation4], %s636
        %s638 = sand.u32 %s290, 1
        %s639 = smul.addr %s638, 64
        %s640 = scalar_lea.vmem [#allocation19], %s639
        // Predicated region
        $region109: #{tpu_custom_call.1} parent=67 // pred_check
          %p641 = pneg %p303
        $region110: #{tpu_custom_call.1} parent=67 // pred_check_branch
          %643 = sbr.rel (%p641) target = $region112
        $region111: #{tpu_custom_call.1} parent=67 // pred_region
          %644 = dma.done %s637, 1024
        $region112: #{tpu_custom_call.1} parent=67 // pred_fallthru
          _
        // Predicated region
        $region113: #{tpu_custom_call.1} parent=67 // pred_check
          %p645 = pneg %p324
        $region114: #{tpu_custom_call.1} parent=67 // pred_check_branch
          %647 = sbr.rel (%p645) target = $region116
        $region115: #{tpu_custom_call.1} parent=67 // pred_region
          %648 = dma.done [#allocation7], 16
        $region116: #{tpu_custom_call.1} parent=67 // pred_fallthru
          _
        %s649 = sand.u32 %s40, 1
        %s650 = scalar_lea.sflag [#allocation4], %s649
        %s651 = sand.u32 %s60, 1
        %s652 = smul.addr %s651, 8
        %s653 = scalar_lea.vmem [#allocation3], %s652
        %p654 = pneg %p73
        %p655 = pneg %p70
        %s656 = sand.u32 %s40, 1
        %s657 = scalar_lea.sflag [#allocation7], %s656
        %s658 = sand.u32 %s86, 1
        %s659 = smul.addr %s658, 2
        %s660 = scalar_lea.vmem [#allocation6], %s659
        %p661 = pneg %p99
        %p662 = pneg %p96
        %p663 = pneg %p120
        %p664 = pneg %p117
        %p665 = pneg %p141
        %p666 = pneg %p138
        %p667 = pneg %p162
        %p668 = pneg %p159
        %p669 = pneg %p183
        %p670 = pneg %p180
        %p671 = pneg %p204
        %p672 = pneg %p201
        %p673 = pneg %p225
        %p674 = pneg %p222
        %s675 = sand.u32 %s40, 1
        %s676 = scalar_lea.sflag [#allocation4], %s675
        %s677 = sand.u32 %s238, 1
        %s678 = smul.addr %s677, 64
        %s679 = scalar_lea.vmem [#allocation17], %s678
        %p680 = pneg %p251
        %p681 = pneg %p248
        %s682 = sand.u32 %s40, 1
        %s683 = scalar_lea.sflag [#allocation7], %s682
        %s684 = sand.u32 %s264, 1
        %s685 = scalar_lea.vmem [#allocation18], %s684
        %p686 = pneg %p277
        %p687 = pneg %p274
        %s688 = sand.u32 %s40, 1
        %s689 = scalar_lea.sflag [#allocation4], %s688
        %s690 = sand.u32 %s290, 1
        %s691 = smul.addr %s690, 64
        %s692 = scalar_lea.vmem [#allocation19], %s691
        %p693 = pneg %p303
        %p694 = pneg %p300
        %p695 = pneg %p324
        %p696 = pneg %p321
        %p697 = pneg %p350
        %p698 = pneg %p347
        %s699 = sand.u32 %s337, 1
        %s700 = scalar_lea.sflag [#allocation5], %s699
        %s701 = sand.u32 %s337, 1
        %s702 = smul.addr %s701, 8
        %s703 = scalar_lea.vmem [#allocation21], %s702
        %p704 = pneg %p376
        %p705 = pneg %p373
        %s706 = sand.u32 %s363, 1
        %s707 = scalar_lea.sflag [#allocation23], %s706
        %s708 = sand.u32 %s363, 1
        %s709 = smul.addr %s708, 16
        %s710 = scalar_lea.vmem [#allocation22], %s709
        %s711 = smul.u32 16, %s45
        %p713 = scmp.eq.s32.totalorder %s45, 0
        // Predicated region
        $region117: #{tpu_custom_call.1} parent=67 // pred_check
          %p714 = pneg %p713
        $region118: #{tpu_custom_call.1} parent=67 // pred_check_branch
          %716 = sbr.rel (%p714) target = $region120
        $region119: #{tpu_custom_call.1} parent=67 // pred_region
          %v717 = vld [vmem:[%s581] sm:$0xff]
          %v718 = vpack.c.bf16 %v717, %v717
          %v719 = vld [vmem:[#allocation8] sm:$0xff]
          %v720 = vld [vmem:[#allocation8 + $0x8] sm:$0xf]
          %v721 = vld [vmem:[#allocation8 + $0xc] sm:$0xff]
          %v722 = vld [vmem:[#allocation8 + $0x14] sm:$0xf]
          %v723 = vld [vmem:[#allocation8 + $0x18] sm:$0xff]
          %v724 = vld [vmem:[#allocation8 + $0x20] sm:$0xf]
          %v725 = vld [vmem:[#allocation8 + $0x24] sm:$0xff]
          %v726 = vld [vmem:[#allocation8 + $0x2c] sm:$0xf]
          %v727 = vld [vmem:[#allocation8 + $0x30] sm:$0xff]
          %v728 = vld [vmem:[#allocation8 + $0x38] sm:$0xf]
          %v729 = vld [vmem:[#allocation8 + $0x3c] sm:$0xff]
          %v730 = vld [vmem:[#allocation8 + $0x44] sm:$0xf]
          %v731 = vld [vmem:[#allocation8 + $0x48] sm:$0xff]
          %v732 = vld [vmem:[#allocation8 + $0x50] sm:$0xf]
          %v733 = vld [vmem:[#allocation8 + $0x54] sm:$0xff]
          %v734 = vld [vmem:[#allocation8 + $0x5c] sm:$0xf]
          %v735 = vld [vmem:[#allocation8 + $0x60] sm:$0xff]
          %v736 = vld [vmem:[#allocation8 + $0x68] sm:$0xf]
          %v737 = vld [vmem:[#allocation8 + $0x6c] sm:$0xff]
          %v738 = vld [vmem:[#allocation8 + $0x74] sm:$0xf]
          %v739 = vld [vmem:[#allocation8 + $0x78] sm:$0xff]
          %v740 = vld [vmem:[#allocation8 + $0x80] sm:$0xf]
          %v741 = vld [vmem:[#allocation8 + $0x84] sm:$0xff]
          %v742 = vld [vmem:[#allocation8 + $0x8c] sm:$0xf]
          %v743 = vld [vmem:[#allocation8 + $0x90] sm:$0xff]
          %v744 = vld [vmem:[#allocation8 + $0x98] sm:$0xf]
          %v745 = vld [vmem:[#allocation8 + $0x9c] sm:$0xff]
          %v746 = vld [vmem:[#allocation8 + $0xa4] sm:$0xf]
          %v747 = vld [vmem:[#allocation8 + $0xa8] sm:$0xff]
          %v748 = vld [vmem:[#allocation8 + $0xb0] sm:$0xf]
          %v749 = vld [vmem:[#allocation8 + $0xb4] sm:$0xff]
          %v750 = vld [vmem:[#allocation8 + $0xbc] sm:$0xf]
          %v751 = vld [vmem:[#allocation9] sm:$0x7]
          %v753 = vlaneseq
          %v754 = vshrl.u32 %v753, 7
          %v755 = vsub.s32 0, %v754
          %v756 = vrot.slane %v751, %v755
          %v757 = vlaneseq
          %v758 = vshrl.u32 %v757, 7
          %v759 = vsub.s32 1, %v758
          %v760 = vrot.slane %v751, %v759
          %v761 = vlaneseq
          %v762 = vshrl.u32 %v761, 7
          %v763 = vsub.s32 2, %v762
          %v764 = vrot.slane %v751, %v763
          %v800 = vunpack.c.l.b16 %v719
          %v801 = vunpack.c.h.b16 %v719
          %v802 = vunpack.c.l.b16 %v720
          %v803 = vunpack.c.l.b16 %v721
          %v804 = vunpack.c.h.b16 %v721
          %v805 = vunpack.c.l.b16 %v722
          %v806 = vunpack.c.l.b16 %v723
          %v807 = vunpack.c.h.b16 %v723
          %v808 = vunpack.c.l.b16 %v724
          %v809 = vunpack.c.l.b16 %v725
          %v810 = vunpack.c.h.b16 %v725
          %v811 = vunpack.c.l.b16 %v726
          %v812 = vunpack.c.l.b16 %v727
          %v813 = vunpack.c.h.b16 %v727
          %v814 = vunpack.c.l.b16 %v728
          %v815 = vunpack.c.l.b16 %v729
          %v816 = vunpack.c.h.b16 %v729
          %v817 = vunpack.c.l.b16 %v730
          %v818 = vunpack.c.l.b16 %v731
          %v819 = vunpack.c.h.b16 %v731
          %v820 = vunpack.c.l.b16 %v732
          %v821 = vunpack.c.l.b16 %v733
          %v822 = vunpack.c.h.b16 %v733
          %v823 = vunpack.c.l.b16 %v734
          %v824 = vunpack.c.l.b16 %v735
          %v825 = vunpack.c.h.b16 %v735
          %v826 = vunpack.c.l.b16 %v736
          %v827 = vunpack.c.l.b16 %v737
          %v828 = vunpack.c.h.b16 %v737
          %v829 = vunpack.c.l.b16 %v738
          %v830 = vunpack.c.l.b16 %v739
          %v831 = vunpack.c.h.b16 %v739
          %v832 = vunpack.c.l.b16 %v740
          %v833 = vunpack.c.l.b16 %v741
          %v834 = vunpack.c.h.b16 %v741
          %v835 = vunpack.c.l.b16 %v742
          %v836 = vunpack.c.l.b16 %v743
          %v837 = vunpack.c.h.b16 %v743
          %v838 = vunpack.c.l.b16 %v744
          %v839 = vunpack.c.l.b16 %v745
          %v840 = vunpack.c.h.b16 %v745
          %v841 = vunpack.c.l.b16 %v746
          %v842 = vunpack.c.l.b16 %v747
          %v843 = vunpack.c.h.b16 %v747
          %v844 = vunpack.c.l.b16 %v748
          %v845 = vunpack.c.l.b16 %v749
          %v846 = vunpack.c.h.b16 %v749
          %v847 = vunpack.c.l.b16 %v750
          %v848 = vpack.c.b16 %v803, %v800
          %v849 = vpack.c.b16 %v804, %v801
          %v850 = vpack.c.b16 %v805, %v802
          %v851 = vpack.c.b16 %v809, %v806
          %v852 = vpack.c.b16 %v810, %v807
          %v853 = vpack.c.b16 %v811, %v808
          %v854 = vpack.c.b16 %v815, %v812
          %v855 = vpack.c.b16 %v816, %v813
          %v856 = vpack.c.b16 %v817, %v814
          %v857 = vpack.c.b16 %v821, %v818
          %v858 = vpack.c.b16 %v822, %v819
          %v859 = vpack.c.b16 %v823, %v820
          %v860 = vpack.c.b16 %v827, %v824
          %v861 = vpack.c.b16 %v828, %v825
          %v862 = vpack.c.b16 %v829, %v826
          %v863 = vpack.c.b16 %v833, %v830
          %v864 = vpack.c.b16 %v834, %v831
          %v865 = vpack.c.b16 %v835, %v832
          %v866 = vpack.c.b16 %v839, %v836
          %v867 = vpack.c.b16 %v840, %v837
          %v868 = vpack.c.b16 %v841, %v838
          %v869 = vpack.c.b16 %v845, %v842
          %v870 = vpack.c.b16 %v846, %v843
          %v871 = vpack.c.b16 %v847, %v844
          %896 = vmatprep.subr.bf16.mxu0 %v849
          %897 = vmatpush1.bf16.msra.mxu0 %v848
          %898 = vmatprep.subr.bf16.mxu0 %v852
          %899 = vmatpush1.bf16.msra.mxu0 %v851
          %900 = vmatprep.subr.bf16.mxu0 %v855
          %901 = vmatpush1.bf16.msra.mxu0 %v854
          %902 = vmatprep.subr.bf16.mxu0 %v858
          %903 = vmatpush1.bf16.msra.mxu0 %v857
          %904 = vmatprep.subr.bf16.mxu0 %v861
          %905 = vmatpush1.bf16.msra.mxu0 %v860
          %906 = vmatprep.subr.bf16.mxu0 %v864
          %907 = vmatpush1.bf16.msra.mxu0 %v863
          %908 = vmatprep.subr.bf16.mxu0 %v867
          %909 = vmatpush1.bf16.msra.mxu0 %v866
          %910 = vmatprep.subr.bf16.mxu0 %v870
          %911 = vmatpush1.bf16.msra.mxu0 %v869
          %912 = vmatprep.subr.bf16.mxu0 0
          %913 = vmatpush1.bf16.msra.mxu0 0
          %914 = vmatprep.subr.bf16.mxu0 0
          %915 = vmatpush1.bf16.msra.mxu0 0
          %916 = vmatprep.subr.bf16.mxu0 0
          %917 = vmatpush1.bf16.msra.mxu0 0
          %918 = vmatprep.subr.bf16.mxu0 0
          %919 = vmatpush1.bf16.msra.mxu0 0
          %920 = vmatprep.subr.bf16.mxu0 0
          %921 = vmatpush1.bf16.msra.mxu0 0
          %922 = vmatprep.subr.bf16.mxu0 0
          %923 = vmatpush1.bf16.msra.mxu0 0
          %924 = vmatprep.subr.bf16.mxu0 0
          %925 = vmatpush1.bf16.msra.mxu0 0
          %926 = vmatprep.subr.bf16.mxu0 0
          %927 = vmatpush1.bf16.msra.mxu0 0
          %928 = vmatprep.mubr.bf16.mxu0 0
          %929 = vmatmul.mubr.bf16.gmra.mrb[0].mxu0 %v718
          %v930 = vpop.f32.mrb[0].mxu0
          %v931 = vadd.f32 %v756, %v930
          %v932 = vpop.f32.mrb[0].mxu0
          %v933 = vadd.f32 %v760, %v932
          %v934 = vpop.f32.mrb[0].mxu0
          %v935 = vpop.f32.mrb[0].mxu0
          %936 = vdwg.mxu0
          %937 = vmatprep.subr.bf16.mxu0 0
          %938 = vmatpush1.bf16.msra.mxu0 %v850
          %939 = vmatprep.subr.bf16.mxu0 0
          %940 = vmatpush1.bf16.msra.mxu0 %v853
          %941 = vmatprep.subr.bf16.mxu0 0
          %942 = vmatpush1.bf16.msra.mxu0 %v856
          %943 = vmatprep.subr.bf16.mxu0 0
          %944 = vmatpush1.bf16.msra.mxu0 %v859
          %945 = vmatprep.subr.bf16.mxu0 0
          %946 = vmatpush1.bf16.msra.mxu0 %v862
          %947 = vmatprep.subr.bf16.mxu0 0
          %948 = vmatpush1.bf16.msra.mxu0 %v865
          %949 = vmatprep.subr.bf16.mxu0 0
          %950 = vmatpush1.bf16.msra.mxu0 %v868
          %951 = vmatprep.subr.bf16.mxu0 0
          %952 = vmatpush1.bf16.msra.mxu0 %v871
          %953 = vmatprep.subr.bf16.mxu0 0
          %954 = vmatpush1.bf16.msra.mxu0 0
          %955 = vmatprep.subr.bf16.mxu0 0
          %956 = vmatpush1.bf16.msra.mxu0 0
          %957 = vmatprep.subr.bf16.mxu0 0
          %958 = vmatpush1.bf16.msra.mxu0 0
          %959 = vmatprep.subr.bf16.mxu0 0
          %960 = vmatpush1.bf16.msra.mxu0 0
          %961 = vmatprep.subr.bf16.mxu0 0
          %962 = vmatpush1.bf16.msra.mxu0 0
          %963 = vmatprep.subr.bf16.mxu0 0
          %964 = vmatpush1.bf16.msra.mxu0 0
          %965 = vmatprep.subr.bf16.mxu0 0
          %966 = vmatpush1.bf16.msra.mxu0 0
          %967 = vmatprep.subr.bf16.mxu0 0
          %968 = vmatpush1.bf16.msra.mxu0 0
          %969 = vmatprep.mubr.bf16.mxu0 0
          %970 = vmatmul.mubr.bf16.gmra.mrb[0].mxu0 %v718
          %v971 = vpop.f32.mrb[0].mxu0
          %v972 = vadd.f32 %v764, %v971
          %v973 = vpop.f32.mrb[0].mxu0
          %v974 = vpop.f32.mrb[0].mxu0
          %v975 = vpop.f32.mrb[0].mxu0
          %976 = vdwg.mxu0
          %v977 = vld [vmem:[%s590] sm:$0x3]
          %v978 = vunpack.c.0.s8 %v977
          %v979 = vcvt.s32.f32 %v978
          %v980 = vmul.f32 %v979, -1e+09
          %v981 = vmul.f32 %v931, 0.17677669
          %v982 = vpack.c.bf16 %v981, %v981
          %v983 = vpack.c.bf16 %v933, %v933
          %v984 = vpack.c.bf16 %v972, %v972
          %vm985 = vcmask 261120
          %v987 = vsel %vm985, %v982, 0
          %v990 = vsel %vm985, %v983, 0
          %992 = vmatprep.subr.bf16.mxu0 0
          %993 = vmatpush1.bf16.xpose.msra.mxu0 %v990
          %994 = vmatprep.subr.bf16.mxu0 0
          %995 = vmatpush1.bf16.xpose.msra.mxu0 0
          %996 = vmatprep.subr.bf16.mxu0 0
          %997 = vmatpush1.bf16.xpose.msra.mxu0 0
          %998 = vmatprep.subr.bf16.mxu0 0
          %999 = vmatpush1.bf16.xpose.msra.mxu0 0
          %1000 = vmatprep.subr.bf16.mxu0 0
          %1001 = vmatpush1.bf16.xpose.msra.mxu0 0
          %1002 = vmatprep.subr.bf16.mxu0 0
          %1003 = vmatpush1.bf16.xpose.msra.mxu0 0
          %1004 = vmatprep.subr.bf16.mxu0 0
          %1005 = vmatpush1.bf16.xpose.msra.mxu0 0
          %1006 = vmatprep.subr.bf16.mxu0 0
          %1007 = vmatpush1.bf16.xpose.msra.mxu0 0
          %1008 = vmatprep.subr.bf16.mxu0 0
          %1009 = vmatpush1.bf16.xpose.msra.mxu0 0
          %1010 = vmatprep.subr.bf16.mxu0 0
          %1011 = vmatpush1.bf16.xpose.msra.mxu0 0
          %1012 = vmatprep.subr.bf16.mxu0 0
          %1013 = vmatpush1.bf16.xpose.msra.mxu0 0
          %1014 = vmatprep.subr.bf16.mxu0 0
          %1015 = vmatpush1.bf16.xpose.msra.mxu0 0
          %1016 = vmatprep.subr.bf16.mxu0 0
          %1017 = vmatpush1.bf16.xpose.msra.mxu0 0
          %1018 = vmatprep.subr.bf16.mxu0 0
          %1019 = vmatpush1.bf16.xpose.msra.mxu0 0
          %1020 = vmatprep.subr.bf16.mxu0 0
          %1021 = vmatpush1.bf16.xpose.msra.mxu0 0
          %1022 = vmatprep.subr.bf16.mxu0 0
          %1023 = vmatpush1.bf16.xpose.msra.mxu0 0
          %1024 = vmatprep.mubr.bf16.mxu0 0
          %1025 = vmatmul.mubr.bf16.gmra.mrb[0].mxu0 %v987
          %v1026 = vpop.f32.mrb[0].mxu0
          %v1027 = vadd.f32 %v980, %v1026
          %v1028 = vpop.f32.mrb[0].mxu0
          %v1029 = vpop.f32.mrb[0].mxu0
          %v1030 = vpop.f32.mrb[0].mxu0
          %1031 = vdwg.mxu0
          %vm1032 = vcmask 64512
          %v1033 = vsel %vm1032, %v1027, -inf
          %1034 = vmax.xlane.f32.xlu0 %v1033
          %v1035 = vpop.xlane.xlu0 %1034
          %v1036 = vsub.f32 %v1027, %v1035
          %v1037 = vmul.f32 %v1036, 1.442695
          %v1038 = vpow.pop %v1037
          %v1039 = vsel %vm1032, %v1038, 0.0
          %1040 = vadd.xlane.f32.xlu0 %v1039
          %v1041 = vpop.xlane.xlu0 %1040
          %v1042 = vrcp.pop %v1041
          %v1043 = vmul.f32 %v1038, %v1042
          %v1044 = vpack.c.bf16 %v1043, %v1043
          %vm1045 = vcmask 60416
          %1046 = vst.msk [vmem:[%s710] sm:$0xf] %vm1045, %v1044
          %v1048 = vsel %vm1032, %v1044, 0
          %vm1050 = vcmask 1043456
          %v1052 = vsel %vm1050, %v984, 0
          %1054 = vmatprep.subr.bf16.mxu0 0
          %1055 = vmatpush1.bf16.msra.mxu0 %v1052
          %1056 = vmatprep.subr.bf16.mxu0 0
          %1057 = vmatpush1.bf16.msra.mxu0 0
          %1058 = vmatprep.subr.bf16.mxu0 0
          %1059 = vmatpush1.bf16.msra.mxu0 0
          %1060 = vmatprep.subr.bf16.mxu0 0
          %1061 = vmatpush1.bf16.msra.mxu0 0
          %1062 = vmatprep.subr.bf16.mxu0 0
          %1063 = vmatpush1.bf16.msra.mxu0 0
          %1064 = vmatprep.subr.bf16.mxu0 0
          %1065 = vmatpush1.bf16.msra.mxu0 0
          %1066 = vmatprep.subr.bf16.mxu0 0
          %1067 = vmatpush1.bf16.msra.mxu0 0
          %1068 = vmatprep.subr.bf16.mxu0 0
          %1069 = vmatpush1.bf16.msra.mxu0 0
          %1070 = vmatprep.subr.bf16.mxu0 0
          %1071 = vmatpush1.bf16.msra.mxu0 0
          %1072 = vmatprep.subr.bf16.mxu0 0
          %1073 = vmatpush1.bf16.msra.mxu0 0
          %1074 = vmatprep.subr.bf16.mxu0 0
          %1075 = vmatpush1.bf16.msra.mxu0 0
          %1076 = vmatprep.subr.bf16.mxu0 0
          %1077 = vmatpush1.bf16.msra.mxu0 0
          %1078 = vmatprep.subr.bf16.mxu0 0
          %1079 = vmatpush1.bf16.msra.mxu0 0
          %1080 = vmatprep.subr.bf16.mxu0 0
          %1081 = vmatpush1.bf16.msra.mxu0 0
          %1082 = vmatprep.subr.bf16.mxu0 0
          %1083 = vmatpush1.bf16.msra.mxu0 0
          %1084 = vmatprep.subr.bf16.mxu0 0
          %1085 = vmatpush1.bf16.msra.mxu0 0
          %1086 = vmatprep.mubr.bf16.mxu0 0
          %1087 = vmatmul.mubr.bf16.gmra.mrb[0].mxu0 %v1048
          %v1088 = vpop.f32.mrb[0].mxu0
          %v1089 = vadd.f32 0.0, %v1088
          %v1090 = vpop.f32.mrb[0].mxu0
          %v1091 = vpop.f32.mrb[0].mxu0
          %v1092 = vpop.f32.mrb[0].mxu0
          %1093 = vdwg.mxu0
          %v1094 = vpack.c.bf16 %v1089, %v1089
          %1096 = vrot.lane.b32.xlu0 %v982, 96
          %v1097 = vpop.permute.xlu0 %1096
          %1099 = vrot.lane.b32.xlu0 %v983, 96
          %v1100 = vpop.permute.xlu0 %1099
          %v1102 = vsel %vm985, %v1097, 0
          %v1105 = vsel %vm985, %v1100, 0
          %1107 = vmatprep.subr.bf16.mxu0 0
          %1108 = vmatpush1.bf16.xpose.msra.mxu0 %v1105
          %1109 = vmatprep.subr.bf16.mxu0 0
          %1110 = vmatpush1.bf16.xpose.msra.mxu0 0
          %1111 = vmatprep.subr.bf16.mxu0 0
          %1112 = vmatpush1.bf16.xpose.msra.mxu0 0
          %1113 = vmatprep.subr.bf16.mxu0 0
          %1114 = vmatpush1.bf16.xpose.msra.mxu0 0
          %1115 = vmatprep.subr.bf16.mxu0 0
          %1116 = vmatpush1.bf16.xpose.msra.mxu0 0
          %1117 = vmatprep.subr.bf16.mxu0 0
          %1118 = vmatpush1.bf16.xpose.msra.mxu0 0
          %1119 = vmatprep.subr.bf16.mxu0 0
          %1120 = vmatpush1.bf16.xpose.msra.mxu0 0
          %1121 = vmatprep.subr.bf16.mxu0 0
          %1122 = vmatpush1.bf16.xpose.msra.mxu0 0
          %1123 = vmatprep.subr.bf16.mxu0 0
          %1124 = vmatpush1.bf16.xpose.msra.mxu0 0
          %1125 = vmatprep.subr.bf16.mxu0 0
          %1126 = vmatpush1.bf16.xpose.msra.mxu0 0
          %1127 = vmatprep.subr.bf16.mxu0 0
          %1128 = vmatpush1.bf16.xpose.msra.mxu0 0
          %1129 = vmatprep.subr.bf16.mxu0 0
          %1130 = vmatpush1.bf16.xpose.msra.mxu0 0
          %1131 = vmatprep.subr.bf16.mxu0 0
          %1132 = vmatpush1.bf16.xpose.msra.mxu0 0
          %1133 = vmatprep.subr.bf16.mxu0 0
          %1134 = vmatpush1.bf16.xpose.msra.mxu0 0
          %1135 = vmatprep.subr.bf16.mxu0 0
          %1136 = vmatpush1.bf16.xpose.msra.mxu0 0
          %1137 = vmatprep.subr.bf16.mxu0 0
          %1138 = vmatpush1.bf16.xpose.msra.mxu0 0
          %1139 = vmatprep.mubr.bf16.mxu0 0
          %1140 = vmatmul.mubr.bf16.gmra.mrb[0].mxu0 %v1102
          %v1141 = vpop.f32.mrb[0].mxu0
          %v1142 = vadd.f32 %v980, %v1141
          %v1143 = vpop.f32.mrb[0].mxu0
          %v1144 = vpop.f32.mrb[0].mxu0
          %v1145 = vpop.f32.mrb[0].mxu0
          %1146 = vdwg.mxu0
          %v1147 = vsel %vm1032, %v1142, -inf
          %1148 = vmax.xlane.f32.xlu0 %v1147
          %v1149 = vpop.xlane.xlu0 %1148
          %v1150 = vsub.f32 %v1142, %v1149
          %v1151 = vmul.f32 %v1150, 1.442695
          %v1152 = vpow.pop %v1151
          %v1153 = vsel %vm1032, %v1152, 0.0
          %1154 = vadd.xlane.f32.xlu0 %v1153
          %v1155 = vpop.xlane.xlu0 %1154
          %v1156 = vrcp.pop %v1155
          %v1157 = vmul.f32 %v1152, %v1156
          %v1158 = vpack.c.bf16 %v1157, %v1157
          %s1159 = scalar_lea.vmem %s710, 4 [#allocation22]
          %1160 = vst.msk [vmem:[%s1159] sm:$0xf] %vm1045, %v1158
          %1162 = vrot.lane.b32.xlu0 %v984, 96
          %v1163 = vpop.permute.xlu0 %1162
          %v1165 = vsel %vm1032, %v1158, 0
          %v1168 = vsel %vm1050, %v1163, 0
          %1170 = vmatprep.subr.bf16.mxu0 0
          %1171 = vmatpush1.bf16.msra.mxu0 %v1168
          %1172 = vmatprep.subr.bf16.mxu0 0
          %1173 = vmatpush1.bf16.msra.mxu0 0
          %1174 = vmatprep.subr.bf16.mxu0 0
          %1175 = vmatpush1.bf16.msra.mxu0 0
          %1176 = vmatprep.subr.bf16.mxu0 0
          %1177 = vmatpush1.bf16.msra.mxu0 0
          %1178 = vmatprep.subr.bf16.mxu0 0
          %1179 = vmatpush1.bf16.msra.mxu0 0
          %1180 = vmatprep.subr.bf16.mxu0 0
          %1181 = vmatpush1.bf16.msra.mxu0 0
          %1182 = vmatprep.subr.bf16.mxu0 0
          %1183 = vmatpush1.bf16.msra.mxu0 0
          %1184 = vmatprep.subr.bf16.mxu0 0
          %1185 = vmatpush1.bf16.msra.mxu0 0
          %1186 = vmatprep.subr.bf16.mxu0 0
          %1187 = vmatpush1.bf16.msra.mxu0 0
          %1188 = vmatprep.subr.bf16.mxu0 0
          %1189 = vmatpush1.bf16.msra.mxu0 0
          %1190 = vmatprep.subr.bf16.mxu0 0
          %1191 = vmatpush1.bf16.msra.mxu0 0
          %1192 = vmatprep.subr.bf16.mxu0 0
          %1193 = vmatpush1.bf16.msra.mxu0 0
          %1194 = vmatprep.subr.bf16.mxu0 0
          %1195 = vmatpush1.bf16.msra.mxu0 0
          %1196 = vmatprep.subr.bf16.mxu0 0
          %1197 = vmatpush1.bf16.msra.mxu0 0
          %1198 = vmatprep.subr.bf16.mxu0 0
          %1199 = vmatpush1.bf16.msra.mxu0 0
          %1200 = vmatprep.subr.bf16.mxu0 0
          %1201 = vmatpush1.bf16.msra.mxu0 0
          %1202 = vmatprep.mubr.bf16.mxu0 0
          %1203 = vmatmul.mubr.bf16.gmra.mrb[0].mxu0 %v1165
          %v1204 = vpop.f32.mrb[0].mxu0
          %v1205 = vadd.f32 0.0, %v1204
          %v1206 = vpop.f32.mrb[0].mxu0
          %v1207 = vpop.f32.mrb[0].mxu0
          %v1208 = vpop.f32.mrb[0].mxu0
          %1209 = vdwg.mxu0
          %v1210 = vpack.c.bf16 %v1205, %v1205
          %1211 = vrot.lane.b32.xlu0 %v982, 64
          %v1212 = vpop.permute.xlu0 %1211
          %1213 = vrot.lane.b32.xlu0 %v983, 64
          %v1214 = vpop.permute.xlu0 %1213
          %v1216 = vsel %vm985, %v1212, 0
          %v1219 = vsel %vm985, %v1214, 0
          %1221 = vmatprep.subr.bf16.mxu0 0
          %1222 = vmatpush1.bf16.xpose.msra.mxu0 %v1219
          %1223 = vmatprep.subr.bf16.mxu0 0
          %1224 = vmatpush1.bf16.xpose.msra.mxu0 0
          %1225 = vmatprep.subr.bf16.mxu0 0
          %1226 = vmatpush1.bf16.xpose.msra.mxu0 0
          %1227 = vmatprep.subr.bf16.mxu0 0
          %1228 = vmatpush1.bf16.xpose.msra.mxu0 0
          %1229 = vmatprep.subr.bf16.mxu0 0
          %1230 = vmatpush1.bf16.xpose.msra.mxu0 0
          %1231 = vmatprep.subr.bf16.mxu0 0
          %1232 = vmatpush1.bf16.xpose.msra.mxu0 0
          %1233 = vmatprep.subr.bf16.mxu0 0
          %1234 = vmatpush1.bf16.xpose.msra.mxu0 0
          %1235 = vmatprep.subr.bf16.mxu0 0
          %1236 = vmatpush1.bf16.xpose.msra.mxu0 0
          %1237 = vmatprep.subr.bf16.mxu0 0
          %1238 = vmatpush1.bf16.xpose.msra.mxu0 0
          %1239 = vmatprep.subr.bf16.mxu0 0
          %1240 = vmatpush1.bf16.xpose.msra.mxu0 0
          %1241 = vmatprep.subr.bf16.mxu0 0
          %1242 = vmatpush1.bf16.xpose.msra.mxu0 0
          %1243 = vmatprep.subr.bf16.mxu0 0
          %1244 = vmatpush1.bf16.xpose.msra.mxu0 0
          %1245 = vmatprep.subr.bf16.mxu0 0
          %1246 = vmatpush1.bf16.xpose.msra.mxu0 0
          %1247 = vmatprep.subr.bf16.mxu0 0
          %1248 = vmatpush1.bf16.xpose.msra.mxu0 0
          %1249 = vmatprep.subr.bf16.mxu0 0
          %1250 = vmatpush1.bf16.xpose.msra.mxu0 0
          %1251 = vmatprep.subr.bf16.mxu0 0
          %1252 = vmatpush1.bf16.xpose.msra.mxu0 0
          %1253 = vmatprep.mubr.bf16.mxu0 0
          %1254 = vmatmul.mubr.bf16.gmra.mrb[0].mxu0 %v1216
          %v1255 = vpop.f32.mrb[0].mxu0
          %v1256 = vadd.f32 %v980, %v1255
          %v1257 = vpop.f32.mrb[0].mxu0
          %v1258 = vpop.f32.mrb[0].mxu0
          %v1259 = vpop.f32.mrb[0].mxu0
          %1260 = vdwg.mxu0
          %v1261 = vsel %vm1032, %v1256, -inf
          %1262 = vmax.xlane.f32.xlu0 %v1261
          %v1263 = vpop.xlane.xlu0 %1262
          %v1264 = vsub.f32 %v1256, %v1263
          %v1265 = vmul.f32 %v1264, 1.442695
          %v1266 = vpow.pop %v1265
          %v1267 = vsel %vm1032, %v1266, 0.0
          %1268 = vadd.xlane.f32.xlu0 %v1267
          %v1269 = vpop.xlane.xlu0 %1268
          %v1270 = vrcp.pop %v1269
          %v1271 = vmul.f32 %v1266, %v1270
          %v1272 = vpack.c.bf16 %v1271, %v1271
          %s1273 = scalar_lea.vmem %s710, 8 [#allocation22]
          %1274 = vst.msk [vmem:[%s1273] sm:$0xf] %vm1045, %v1272
          %1275 = vrot.lane.b32.xlu0 %v984, 64
          %v1276 = vpop.permute.xlu0 %1275
          %v1278 = vsel %vm1032, %v1272, 0
          %v1281 = vsel %vm1050, %v1276, 0
          %1283 = vmatprep.subr.bf16.mxu0 0
          %1284 = vmatpush1.bf16.msra.mxu0 %v1281
          %1285 = vmatprep.subr.bf16.mxu0 0
          %1286 = vmatpush1.bf16.msra.mxu0 0
          %1287 = vmatprep.subr.bf16.mxu0 0
          %1288 = vmatpush1.bf16.msra.mxu0 0
          %1289 = vmatprep.subr.bf16.mxu0 0
          %1290 = vmatpush1.bf16.msra.mxu0 0
          %1291 = vmatprep.subr.bf16.mxu0 0
          %1292 = vmatpush1.bf16.msra.mxu0 0
          %1293 = vmatprep.subr.bf16.mxu0 0
          %1294 = vmatpush1.bf16.msra.mxu0 0
          %1295 = vmatprep.subr.bf16.mxu0 0
          %1296 = vmatpush1.bf16.msra.mxu0 0
          %1297 = vmatprep.subr.bf16.mxu0 0
          %1298 = vmatpush1.bf16.msra.mxu0 0
          %1299 = vmatprep.subr.bf16.mxu0 0
          %1300 = vmatpush1.bf16.msra.mxu0 0
          %1301 = vmatprep.subr.bf16.mxu0 0
          %1302 = vmatpush1.bf16.msra.mxu0 0
          %1303 = vmatprep.subr.bf16.mxu0 0
          %1304 = vmatpush1.bf16.msra.mxu0 0
          %1305 = vmatprep.subr.bf16.mxu0 0
          %1306 = vmatpush1.bf16.msra.mxu0 0
          %1307 = vmatprep.subr.bf16.mxu0 0
          %1308 = vmatpush1.bf16.msra.mxu0 0
          %1309 = vmatprep.subr.bf16.mxu0 0
          %1310 = vmatpush1.bf16.msra.mxu0 0
          %1311 = vmatprep.subr.bf16.mxu0 0
          %1312 = vmatpush1.bf16.msra.mxu0 0
          %1313 = vmatprep.subr.bf16.mxu0 0
          %1314 = vmatpush1.bf16.msra.mxu0 0
          %1315 = vmatprep.mubr.bf16.mxu0 0
          %1316 = vmatmul.mubr.bf16.gmra.mrb[0].mxu0 %v1278
          %v1317 = vpop.f32.mrb[0].mxu0
          %v1318 = vadd.f32 0.0, %v1317
          %v1319 = vpop.f32.mrb[0].mxu0
          %v1320 = vpop.f32.mrb[0].mxu0
          %v1321 = vpop.f32.mrb[0].mxu0
          %1322 = vdwg.mxu0
          %v1323 = vpack.c.bf16 %v1318, %v1318
          %1324 = vrot.lane.b32.xlu0 %v982, 32
          %v1325 = vpop.permute.xlu0 %1324
          %1326 = vrot.lane.b32.xlu0 %v983, 32
          %v1327 = vpop.permute.xlu0 %1326
          %v1329 = vsel %vm985, %v1325, 0
          %v1332 = vsel %vm985, %v1327, 0
          %1334 = vmatprep.subr.bf16.mxu0 0
          %1335 = vmatpush1.bf16.xpose.msra.mxu0 %v1332
          %1336 = vmatprep.subr.bf16.mxu0 0
          %1337 = vmatpush1.bf16.xpose.msra.mxu0 0
          %1338 = vmatprep.subr.bf16.mxu0 0
          %1339 = vmatpush1.bf16.xpose.msra.mxu0 0
          %1340 = vmatprep.subr.bf16.mxu0 0
          %1341 = vmatpush1.bf16.xpose.msra.mxu0 0
          %1342 = vmatprep.subr.bf16.mxu0 0
          %1343 = vmatpush1.bf16.xpose.msra.mxu0 0
          %1344 = vmatprep.subr.bf16.mxu0 0
          %1345 = vmatpush1.bf16.xpose.msra.mxu0 0
          %1346 = vmatprep.subr.bf16.mxu0 0
          %1347 = vmatpush1.bf16.xpose.msra.mxu0 0
          %1348 = vmatprep.subr.bf16.mxu0 0
          %1349 = vmatpush1.bf16.xpose.msra.mxu0 0
          %1350 = vmatprep.subr.bf16.mxu0 0
          %1351 = vmatpush1.bf16.xpose.msra.mxu0 0
          %1352 = vmatprep.subr.bf16.mxu0 0
          %1353 = vmatpush1.bf16.xpose.msra.mxu0 0
          %1354 = vmatprep.subr.bf16.mxu0 0
          %1355 = vmatpush1.bf16.xpose.msra.mxu0 0
          %1356 = vmatprep.subr.bf16.mxu0 0
          %1357 = vmatpush1.bf16.xpose.msra.mxu0 0
          %1358 = vmatprep.subr.bf16.mxu0 0
          %1359 = vmatpush1.bf16.xpose.msra.mxu0 0
          %1360 = vmatprep.subr.bf16.mxu0 0
          %1361 = vmatpush1.bf16.xpose.msra.mxu0 0
          %1362 = vmatprep.subr.bf16.mxu0 0
          %1363 = vmatpush1.bf16.xpose.msra.mxu0 0
          %1364 = vmatprep.subr.bf16.mxu0 0
          %1365 = vmatpush1.bf16.xpose.msra.mxu0 0
          %1366 = vmatprep.mubr.bf16.mxu0 0
          %1367 = vmatmul.mubr.bf16.gmra.mrb[0].mxu0 %v1329
          %v1368 = vpop.f32.mrb[0].mxu0
          %v1369 = vadd.f32 %v980, %v1368
          %v1370 = vpop.f32.mrb[0].mxu0
          %v1371 = vpop.f32.mrb[0].mxu0
          %v1372 = vpop.f32.mrb[0].mxu0
          %1373 = vdwg.mxu0
          %v1374 = vsel %vm1032, %v1369, -inf
          %1375 = vmax.xlane.f32.xlu0 %v1374
          %v1376 = vpop.xlane.xlu0 %1375
          %v1377 = vsub.f32 %v1369, %v1376
          %v1378 = vmul.f32 %v1377, 1.442695
          %v1379 = vpow.pop %v1378
          %v1380 = vsel %vm1032, %v1379, 0.0
          %1381 = vadd.xlane.f32.xlu0 %v1380
          %v1382 = vpop.xlane.xlu0 %1381
          %v1383 = vrcp.pop %v1382
          %v1384 = vmul.f32 %v1379, %v1383
          %v1385 = vpack.c.bf16 %v1384, %v1384
          %s1386 = scalar_lea.vmem %s710, 12 [#allocation22]
          %1387 = vst.msk [vmem:[%s1386] sm:$0xf] %vm1045, %v1385
          %1388 = vrot.lane.b32.xlu0 %v984, 32
          %v1389 = vpop.permute.xlu0 %1388
          %v1391 = vsel %vm1032, %v1385, 0
          %v1394 = vsel %vm1050, %v1389, 0
          %1396 = vmatprep.subr.bf16.mxu0 0
          %1397 = vmatpush1.bf16.msra.mxu0 %v1394
          %1398 = vmatprep.subr.bf16.mxu0 0
          %1399 = vmatpush1.bf16.msra.mxu0 0
          %1400 = vmatprep.subr.bf16.mxu0 0
          %1401 = vmatpush1.bf16.msra.mxu0 0
          %1402 = vmatprep.subr.bf16.mxu0 0
          %1403 = vmatpush1.bf16.msra.mxu0 0
          %1404 = vmatprep.subr.bf16.mxu0 0
          %1405 = vmatpush1.bf16.msra.mxu0 0
          %1406 = vmatprep.subr.bf16.mxu0 0
          %1407 = vmatpush1.bf16.msra.mxu0 0
          %1408 = vmatprep.subr.bf16.mxu0 0
          %1409 = vmatpush1.bf16.msra.mxu0 0
          %1410 = vmatprep.subr.bf16.mxu0 0
          %1411 = vmatpush1.bf16.msra.mxu0 0
          %1412 = vmatprep.subr.bf16.mxu0 0
          %1413 = vmatpush1.bf16.msra.mxu0 0
          %1414 = vmatprep.subr.bf16.mxu0 0
          %1415 = vmatpush1.bf16.msra.mxu0 0
          %1416 = vmatprep.subr.bf16.mxu0 0
          %1417 = vmatpush1.bf16.msra.mxu0 0
          %1418 = vmatprep.subr.bf16.mxu0 0
          %1419 = vmatpush1.bf16.msra.mxu0 0
          %1420 = vmatprep.subr.bf16.mxu0 0
          %1421 = vmatpush1.bf16.msra.mxu0 0
          %1422 = vmatprep.subr.bf16.mxu0 0
          %1423 = vmatpush1.bf16.msra.mxu0 0
          %1424 = vmatprep.subr.bf16.mxu0 0
          %1425 = vmatpush1.bf16.msra.mxu0 0
          %1426 = vmatprep.subr.bf16.mxu0 0
          %1427 = vmatpush1.bf16.msra.mxu0 0
          %1428 = vmatprep.mubr.bf16.mxu0 0
          %1429 = vmatmul.mubr.bf16.gmra.mrb[0].mxu0 %v1391
          %v1430 = vpop.f32.mrb[0].mxu0
          %v1431 = vadd.f32 0.0, %v1430
          %v1432 = vpop.f32.mrb[0].mxu0
          %v1433 = vpop.f32.mrb[0].mxu0
          %v1434 = vpop.f32.mrb[0].mxu0
          %1435 = vdwg.mxu0
          %v1436 = vpack.c.bf16 %v1431, %v1431
          %1438 = vrot.lane.b32.xlu0 %v1210, 32
          %v1439 = vpop.permute.xlu0 %1438
          %1441 = vrot.lane.b32.xlu0 %v1323, 64
          %v1442 = vpop.permute.xlu0 %1441
          %1444 = vrot.lane.b32.xlu0 %v1436, 96
          %v1445 = vpop.permute.xlu0 %1444
          %v1448 = vsel %vm985, %v1094, %v1439
          %vm1449 = vcmask 523264
          %v1451 = vsel %vm1449, %v1448, %v1442
          %vm1452 = vcmask 785408
          %v1454 = vsel %vm1452, %v1451, %v1445
          %v1456 = vld [vmem:[#allocation11] sm:$0xf]
          %v1457 = vld [vmem:[#allocation11 + $0x4] sm:$0xf]
          %v1458 = vld [vmem:[#allocation11 + $0x8] sm:$0xf]
          %v1459 = vld [vmem:[#allocation11 + $0xc] sm:$0xf]
          %v1460 = vld [vmem:[#allocation11 + $0x10] sm:$0xf]
          %v1461 = vld [vmem:[#allocation11 + $0x14] sm:$0xf]
          %v1462 = vld [vmem:[#allocation11 + $0x18] sm:$0xf]
          %v1463 = vld [vmem:[#allocation11 + $0x1c] sm:$0xf]
          %v1464 = vld [vmem:[#allocation11 + $0x20] sm:$0xf]
          %v1465 = vld [vmem:[#allocation11 + $0x24] sm:$0xf]
          %v1466 = vld [vmem:[#allocation11 + $0x28] sm:$0xf]
          %v1467 = vld [vmem:[#allocation11 + $0x2c] sm:$0xf]
          %v1468 = vld [vmem:[#allocation11 + $0x30] sm:$0xf]
          %v1469 = vld [vmem:[#allocation11 + $0x34] sm:$0xf]
          %v1470 = vld [vmem:[#allocation11 + $0x38] sm:$0xf]
          %v1471 = vld [vmem:[#allocation11 + $0x3c] sm:$0xf]
          %v1472 = vld [vmem:[#allocation12] sm:$0x1]
          %v1474 = vlaneseq
          %v1475 = vshrl.u32 %v1474, 7
          %v1476 = vsub.s32 0, %v1475
          %v1477 = vrot.slane %v1472, %v1476
          %v1495 = vunpack.c.l.b16 %v1456
          %v1496 = vunpack.c.l.b16 %v1457
          %v1497 = vunpack.c.l.b16 %v1458
          %v1498 = vunpack.c.l.b16 %v1459
          %v1499 = vunpack.c.l.b16 %v1460
          %v1500 = vunpack.c.l.b16 %v1461
          %v1501 = vunpack.c.l.b16 %v1462
          %v1502 = vunpack.c.l.b16 %v1463
          %v1503 = vunpack.c.l.b16 %v1464
          %v1504 = vunpack.c.l.b16 %v1465
          %v1505 = vunpack.c.l.b16 %v1466
          %v1506 = vunpack.c.l.b16 %v1467
          %v1507 = vunpack.c.l.b16 %v1468
          %v1508 = vunpack.c.l.b16 %v1469
          %v1509 = vunpack.c.l.b16 %v1470
          %v1510 = vunpack.c.l.b16 %v1471
          %v1511 = vpack.c.b16 %v1496, %v1495
          %v1512 = vpack.c.b16 %v1498, %v1497
          %v1513 = vpack.c.b16 %v1500, %v1499
          %v1514 = vpack.c.b16 %v1502, %v1501
          %v1515 = vpack.c.b16 %v1504, %v1503
          %v1516 = vpack.c.b16 %v1506, %v1505
          %v1517 = vpack.c.b16 %v1508, %v1507
          %v1518 = vpack.c.b16 %v1510, %v1509
          %1527 = vmatprep.subr.bf16.mxu0 0
          %1528 = vmatpush1.bf16.msra.mxu0 %v1511
          %1529 = vmatprep.subr.bf16.mxu0 0
          %1530 = vmatpush1.bf16.msra.mxu0 %v1512
          %1531 = vmatprep.subr.bf16.mxu0 0
          %1532 = vmatpush1.bf16.msra.mxu0 %v1513
          %1533 = vmatprep.subr.bf16.mxu0 0
          %1534 = vmatpush1.bf16.msra.mxu0 %v1514
          %1535 = vmatprep.subr.bf16.mxu0 0
          %1536 = vmatpush1.bf16.msra.mxu0 %v1515
          %1537 = vmatprep.subr.bf16.mxu0 0
          %1538 = vmatpush1.bf16.msra.mxu0 %v1516
          %1539 = vmatprep.subr.bf16.mxu0 0
          %1540 = vmatpush1.bf16.msra.mxu0 %v1517
          %1541 = vmatprep.subr.bf16.mxu0 0
          %1542 = vmatpush1.bf16.msra.mxu0 %v1518
          %1543 = vmatprep.subr.bf16.mxu0 0
          %1544 = vmatpush1.bf16.msra.mxu0 0
          %1545 = vmatprep.subr.bf16.mxu0 0
          %1546 = vmatpush1.bf16.msra.mxu0 0
          %1547 = vmatprep.subr.bf16.mxu0 0
          %1548 = vmatpush1.bf16.msra.mxu0 0
          %1549 = vmatprep.subr.bf16.mxu0 0
          %1550 = vmatpush1.bf16.msra.mxu0 0
          %1551 = vmatprep.subr.bf16.mxu0 0
          %1552 = vmatpush1.bf16.msra.mxu0 0
          %1553 = vmatprep.subr.bf16.mxu0 0
          %1554 = vmatpush1.bf16.msra.mxu0 0
          %1555 = vmatprep.subr.bf16.mxu0 0
          %1556 = vmatpush1.bf16.msra.mxu0 0
          %1557 = vmatprep.subr.bf16.mxu0 0
          %1558 = vmatpush1.bf16.msra.mxu0 0
          %1559 = vmatprep.mubr.bf16.mxu0 0
          %1560 = vmatmul.mubr.bf16.gmra.mrb[0].mxu0 %v1454
          %v1561 = vpop.f32.mrb[0].mxu0
          %v1562 = vadd.f32 %v1477, %v1561
          %v1563 = vpop.f32.mrb[0].mxu0
          %v1564 = vpop.f32.mrb[0].mxu0
          %v1565 = vpop.f32.mrb[0].mxu0
          %1566 = vdwg.mxu0
          %v1567 = vadd.f32 %v1562, %v717
          %1568 = vadd.xlane.f32.xlu0 %v1567
          %v1569 = vpop.xlane.xlu0 %1568
          %v1570 = vrcp.pop 128.0
          %v1571 = vmul.f32 %v1569, %v1570
          %v1572 = vsub.f32 %v1567, %v1571
          %v1573 = vmul.f32 %v1572, %v1572
          %1574 = vadd.xlane.f32.xlu0 %v1573
          %v1575 = vpop.xlane.xlu0 %1574
          %v1576 = vmul.f32 %v1575, %v1570
          %v1577 = vadd.f32 %v1576, 1e-05
          %v1578 = vrsqrt.pop %v1577
          %v1579 = vmul.f32 %v1572, %v1578
          %v1580 = vld [vmem:[#allocation14] sm:$0x1]
          %v1582 = vlaneseq
          %v1583 = vshrl.u32 %v1582, 7
          %v1584 = vsub.s32 0, %v1583
          %v1585 = vrot.slane %v1580, %v1584
          %v1587 = vmul.f32 %v1579, %v1585
          %v1588 = vld [vmem:[#allocation15] sm:$0x1]
          %v1590 = vlaneseq
          %v1591 = vshrl.u32 %v1590, 7
          %v1592 = vsub.s32 0, %v1591
          %v1593 = vrot.slane %v1588, %v1592
          %v1595 = vadd.f32 %v1587, %v1593
          %v1596 = vpack.c.bf16 %v1595, %v1595
          %1597 = vst [vmem:[#allocation2] sm:$0xf] %v1596
          %v1598 = vld [vmem:[#allocation20] sm:$0x1]
          %v1600 = vlaneseq
          %v1601 = vshrl.u32 %v1600, 7
          %v1602 = vsub.s32 0, %v1601
          %v1603 = vrot.slane %v1598, %v1602
          %1605 = vst [vmem:[%s703] sm:$0xff] %v1603
        $region120: #{tpu_custom_call.1} parent=67 // pred_fallthru
          _
        %v1606 = vld [vmem:[#allocation2] sm:$0xf]
        %v1607 = vld [vmem:[%s623] sm:$0xf]
        %v1608 = vld [vmem:[%s623 + $0x4] sm:$0xf]
        %v1609 = vld [vmem:[%s623 + $0x8] sm:$0xf]
        %v1610 = vld [vmem:[%s623 + $0xc] sm:$0xf]
        %v1611 = vld [vmem:[%s623 + $0x10] sm:$0xf]
        %v1612 = vld [vmem:[%s623 + $0x14] sm:$0xf]
        %v1613 = vld [vmem:[%s623 + $0x18] sm:$0xf]
        %v1614 = vld [vmem:[%s623 + $0x1c] sm:$0xf]
        %v1615 = vld [vmem:[%s623 + $0x20] sm:$0xf]
        %v1616 = vld [vmem:[%s623 + $0x24] sm:$0xf]
        %v1617 = vld [vmem:[%s623 + $0x28] sm:$0xf]
        %v1618 = vld [vmem:[%s623 + $0x2c] sm:$0xf]
        %v1619 = vld [vmem:[%s623 + $0x30] sm:$0xf]
        %v1620 = vld [vmem:[%s623 + $0x34] sm:$0xf]
        %v1621 = vld [vmem:[%s623 + $0x38] sm:$0xf]
        %v1622 = vld [vmem:[%s623 + $0x3c] sm:$0xf]
        %v1623 = vld [vmem:[%s631] sm:$0x1]
        %v1625 = vlaneseq
        %v1626 = vshrl.u32 %v1625, 7
        %v1627 = vsub.s32 0, %v1626
        %v1628 = vrot.slane %v1623, %v1627
        %v1646 = vunpack.c.l.b16 %v1607
        %v1647 = vunpack.c.l.b16 %v1608
        %v1648 = vunpack.c.l.b16 %v1609
        %v1649 = vunpack.c.l.b16 %v1610
        %v1650 = vunpack.c.l.b16 %v1611
        %v1651 = vunpack.c.l.b16 %v1612
        %v1652 = vunpack.c.l.b16 %v1613
        %v1653 = vunpack.c.l.b16 %v1614
        %v1654 = vunpack.c.l.b16 %v1615
        %v1655 = vunpack.c.l.b16 %v1616
        %v1656 = vunpack.c.l.b16 %v1617
        %v1657 = vunpack.c.l.b16 %v1618
        %v1658 = vunpack.c.l.b16 %v1619
        %v1659 = vunpack.c.l.b16 %v1620
        %v1660 = vunpack.c.l.b16 %v1621
        %v1661 = vunpack.c.l.b16 %v1622
        %v1662 = vpack.c.b16 %v1647, %v1646
        %v1663 = vpack.c.b16 %v1649, %v1648
        %v1664 = vpack.c.b16 %v1651, %v1650
        %v1665 = vpack.c.b16 %v1653, %v1652
        %v1666 = vpack.c.b16 %v1655, %v1654
        %v1667 = vpack.c.b16 %v1657, %v1656
        %v1668 = vpack.c.b16 %v1659, %v1658
        %v1669 = vpack.c.b16 %v1661, %v1660
        %1678 = vmatprep.subr.bf16.mxu0 0
        %1679 = vmatpush1.bf16.msra.mxu0 %v1662
        %1680 = vmatprep.subr.bf16.mxu0 0
        %1681 = vmatpush1.bf16.msra.mxu0 %v1663
        %1682 = vmatprep.subr.bf16.mxu0 0
        %1683 = vmatpush1.bf16.msra.mxu0 %v1664
        %1684 = vmatprep.subr.bf16.mxu0 0
        %1685 = vmatpush1.bf16.msra.mxu0 %v1665
        %1686 = vmatprep.subr.bf16.mxu0 0
        %1687 = vmatpush1.bf16.msra.mxu0 %v1666
        %1688 = vmatprep.subr.bf16.mxu0 0
        %1689 = vmatpush1.bf16.msra.mxu0 %v1667
        %1690 = vmatprep.subr.bf16.mxu0 0
        %1691 = vmatpush1.bf16.msra.mxu0 %v1668
        %1692 = vmatprep.subr.bf16.mxu0 0
        %1693 = vmatpush1.bf16.msra.mxu0 %v1669
        %1694 = vmatprep.subr.bf16.mxu0 0
        %1695 = vmatpush1.bf16.msra.mxu0 0
        %1696 = vmatprep.subr.bf16.mxu0 0
        %1697 = vmatpush1.bf16.msra.mxu0 0
        %1698 = vmatprep.subr.bf16.mxu0 0
        %1699 = vmatpush1.bf16.msra.mxu0 0
        %1700 = vmatprep.subr.bf16.mxu0 0
        %1701 = vmatpush1.bf16.msra.mxu0 0
        %1702 = vmatprep.subr.bf16.mxu0 0
        %1703 = vmatpush1.bf16.msra.mxu0 0
        %1704 = vmatprep.subr.bf16.mxu0 0
        %1705 = vmatpush1.bf16.msra.mxu0 0
        %1706 = vmatprep.subr.bf16.mxu0 0
        %1707 = vmatpush1.bf16.msra.mxu0 0
        %1708 = vmatprep.subr.bf16.mxu0 0
        %1709 = vmatpush1.bf16.msra.mxu0 0
        %1710 = vmatprep.mubr.bf16.mxu0 0
        %1711 = vmatmul.mubr.bf16.gmra.mrb[0].mxu0 %v1606
        %v1712 = vpop.f32.mrb[0].mxu0
        %v1713 = vadd.f32 %v1628, %v1712
        %v1714 = vpop.f32.mrb[0].mxu0
        %v1715 = vpop.f32.mrb[0].mxu0
        %v1716 = vpop.f32.mrb[0].mxu0
        %1717 = vdwg.mxu0
        %v1718 = vmul.f32 %v1713, %v1713
        %v1719 = vmul.f32 %v1713, %v1718
        %v1720 = vmul.f32 %v1719, 0.044715
        %v1721 = vadd.f32 %v1713, %v1720
        %v1722 = vmul.f32 %v1721, 0.7978846
        %v1723 = vtanh.pop %v1722
        %v1724 = vadd.f32 %v1723, 1.0
        %v1725 = vmul.f32 %v1724, 0.5
        %v1726 = vmul.f32 %v1713, %v1725
        %v1727 = vpack.c.bf16 %v1726, %v1726
        %v1728 = vld [vmem:[%s640] sm:$0xf]
        %v1729 = vld [vmem:[%s640 + $0x4] sm:$0xf]
        %v1730 = vld [vmem:[%s640 + $0x8] sm:$0xf]
        %v1731 = vld [vmem:[%s640 + $0xc] sm:$0xf]
        %v1732 = vld [vmem:[%s640 + $0x10] sm:$0xf]
        %v1733 = vld [vmem:[%s640 + $0x14] sm:$0xf]
        %v1734 = vld [vmem:[%s640 + $0x18] sm:$0xf]
        %v1735 = vld [vmem:[%s640 + $0x1c] sm:$0xf]
        %v1736 = vld [vmem:[%s640 + $0x20] sm:$0xf]
        %v1737 = vld [vmem:[%s640 + $0x24] sm:$0xf]
        %v1738 = vld [vmem:[%s640 + $0x28] sm:$0xf]
        %v1739 = vld [vmem:[%s640 + $0x2c] sm:$0xf]
        %v1740 = vld [vmem:[%s640 + $0x30] sm:$0xf]
        %v1741 = vld [vmem:[%s640 + $0x34] sm:$0xf]
        %v1742 = vld [vmem:[%s640 + $0x38] sm:$0xf]
        %v1743 = vld [vmem:[%s640 + $0x3c] sm:$0xf]
        %v1760 = vunpack.c.l.b16 %v1728
        %v1761 = vunpack.c.l.b16 %v1729
        %v1762 = vunpack.c.l.b16 %v1730
        %v1763 = vunpack.c.l.b16 %v1731
        %v1764 = vunpack.c.l.b16 %v1732
        %v1765 = vunpack.c.l.b16 %v1733
        %v1766 = vunpack.c.l.b16 %v1734
        %v1767 = vunpack.c.l.b16 %v1735
        %v1768 = vunpack.c.l.b16 %v1736
        %v1769 = vunpack.c.l.b16 %v1737
        %v1770 = vunpack.c.l.b16 %v1738
        %v1771 = vunpack.c.l.b16 %v1739
        %v1772 = vunpack.c.l.b16 %v1740
        %v1773 = vunpack.c.l.b16 %v1741
        %v1774 = vunpack.c.l.b16 %v1742
        %v1775 = vunpack.c.l.b16 %v1743
        %v1776 = vpack.c.b16 %v1761, %v1760
        %v1777 = vpack.c.b16 %v1763, %v1762
        %v1778 = vpack.c.b16 %v1765, %v1764
        %v1779 = vpack.c.b16 %v1767, %v1766
        %v1780 = vpack.c.b16 %v1769, %v1768
        %v1781 = vpack.c.b16 %v1771, %v1770
        %v1782 = vpack.c.b16 %v1773, %v1772
        %v1783 = vpack.c.b16 %v1775, %v1774
        %1792 = vmatprep.subr.bf16.mxu0 0
        %1793 = vmatpush1.bf16.msra.mxu0 %v1776
        %1794 = vmatprep.subr.bf16.mxu0 0
        %1795 = vmatpush1.bf16.msra.mxu0 %v1777
        %1796 = vmatprep.subr.bf16.mxu0 0
        %1797 = vmatpush1.bf16.msra.mxu0 %v1778
        %1798 = vmatprep.subr.bf16.mxu0 0
        %1799 = vmatpush1.bf16.msra.mxu0 %v1779
        %1800 = vmatprep.subr.bf16.mxu0 0
        %1801 = vmatpush1.bf16.msra.mxu0 %v1780
        %1802 = vmatprep.subr.bf16.mxu0 0
        %1803 = vmatpush1.bf16.msra.mxu0 %v1781
        %1804 = vmatprep.subr.bf16.mxu0 0
        %1805 = vmatpush1.bf16.msra.mxu0 %v1782
        %1806 = vmatprep.subr.bf16.mxu0 0
        %1807 = vmatpush1.bf16.msra.mxu0 %v1783
        %1808 = vmatprep.subr.bf16.mxu0 0
        %1809 = vmatpush1.bf16.msra.mxu0 0
        %1810 = vmatprep.subr.bf16.mxu0 0
        %1811 = vmatpush1.bf16.msra.mxu0 0
        %1812 = vmatprep.subr.bf16.mxu0 0
        %1813 = vmatpush1.bf16.msra.mxu0 0
        %1814 = vmatprep.subr.bf16.mxu0 0
        %1815 = vmatpush1.bf16.msra.mxu0 0
        %1816 = vmatprep.subr.bf16.mxu0 0
        %1817 = vmatpush1.bf16.msra.mxu0 0
        %1818 = vmatprep.subr.bf16.mxu0 0
        %1819 = vmatpush1.bf16.msra.mxu0 0
        %1820 = vmatprep.subr.bf16.mxu0 0
        %1821 = vmatpush1.bf16.msra.mxu0 0
        %1822 = vmatprep.subr.bf16.mxu0 0
        %1823 = vmatpush1.bf16.msra.mxu0 0
        %1824 = vmatprep.mubr.bf16.mxu0 0
        %1825 = vmatmul.mubr.bf16.gmra.mrb[0].mxu0 %v1727
        %v1826 = vpop.f32.mrb[0].mxu0
        %v1827 = vadd.f32 0.0, %v1826
        %v1828 = vpop.f32.mrb[0].mxu0
        %v1829 = vpop.f32.mrb[0].mxu0
        %v1830 = vpop.f32.mrb[0].mxu0
        %1831 = vdwg.mxu0
        %v1832 = vld [vmem:[%s703] sm:$0xff]
        %v1833 = vadd.f32 %v1832, %v1827
        %1834 = vst [vmem:[%s703] sm:$0xff] %v1833
        %s1835 = sand.u32 %s337, 1
        %s1836 = scalar_lea.sflag [#allocation5], %s1835
        %s1837 = sand.u32 %s337, 1
        %s1838 = smul.addr %s1837, 8
        %s1839 = scalar_lea.vmem [#allocation21], %s1838
        %s1840 = sand.u32 %s363, 1
        %s1841 = scalar_lea.sflag [#allocation23], %s1840
        %s1842 = sand.u32 %s363, 1
        %s1843 = smul.addr %s1842, 16
        %s1844 = scalar_lea.vmem [#allocation22], %s1843
        // Predicated region
        $region121: #{tpu_custom_call.1} parent=67 // pred_check
          %p1845 = pneg %p347
        $region122: #{tpu_custom_call.1} parent=67 // pred_check_branch
          %1847 = sbr.rel (%p1845) target = $region124
        $region123: #{tpu_custom_call.1} parent=67 // pred_region
          %s1849 = ssub.s32 128, 128
          %1850 = vsyncadd %s1836, %s1849
          %s1851 = smul.addr %s44, 128
          %s1852 = scalar_lea.hbm %s12, %s1851
          %s1854 = sshll.u32 %s1839, 4
          %s1855 = int_to_ptr.vmem [resolvable:$true] %s1854
          %1857 = dma.vmem_to_hbm [thread:$0]  %s1855, 128, %s1852, %s1836
        $region124: #{tpu_custom_call.1} parent=67 // pred_fallthru
          _
        // Predicated region
        $region125: #{tpu_custom_call.1} parent=67 // pred_check
          %p1858 = pneg %p373
        $region126: #{tpu_custom_call.1} parent=67 // pred_check_branch
          %1860 = sbr.rel (%p1858) target = $region128
        $region127: #{tpu_custom_call.1} parent=67 // pred_region
          %s1862 = ssub.s32 256, 256
          %1863 = vsyncadd %s1841, %s1862
          %s1864 = smul.addr %s44, 4
          %s1865 = smul.addr %s1864, 64
          %s1866 = scalar_lea.hbm %s13, %s1865
          %s1867 = sshll.u32 %s1844, 4
          %s1868 = int_to_ptr.vmem [resolvable:$true] %s1867
          %1873 = dma.vmem_to_hbm [thread:$0]  %s1868, 256, %s1866, %s1841, 64, 64, 4
        $region128: #{tpu_custom_call.1} parent=67 // pred_fallthru
          _
      $region68: #{tpu_custom_call.1} parent=5 // pred_fallthru
        _
      %p1874 = scmp.le.s32.totalorder 2, %s35
      // Predicated region
      $region129: #{tpu_custom_call.1} parent=5 // pred_check
        %p1875 = pneg %p1874
      $region130: #{tpu_custom_call.1} parent=5 // pred_check_branch
        %1877 = sbr.rel (%p1875) target = $region132
      $region131: #{tpu_custom_call.1} parent=5 // pred_region
        %s1878 = ssub.s32 %s35, 2
        // Predicated region
        $region133: #{tpu_custom_call.1} parent=131 // pred_check
          %p1879 = pneg %p353
        $region134: #{tpu_custom_call.1} parent=131 // pred_check_branch
          %1881 = sbr.rel (%p1879) target = $region136
        $region135: #{tpu_custom_call.1} parent=131 // pred_region
          %s1882 = sand.u32 %s338, 1
          %s1883 = scalar_lea.sflag [#allocation5], %s1882
          %s1884 = sand.u32 %s338, 1
          %s1885 = smul.addr %s1884, 8
          %s1886 = scalar_lea.vmem [#allocation21], %s1885
          %1887 = dma.done %s1883, 128
        $region136: #{tpu_custom_call.1} parent=131 // pred_fallthru
          _
        // Predicated region
        $region137: #{tpu_custom_call.1} parent=131 // pred_check
          %p1888 = pneg %p379
        $region138: #{tpu_custom_call.1} parent=131 // pred_check_branch
          %1890 = sbr.rel (%p1888) target = $region140
        $region139: #{tpu_custom_call.1} parent=131 // pred_region
          %s1891 = sand.u32 %s364, 1
          %s1892 = scalar_lea.sflag [#allocation23], %s1891
          %s1893 = sand.u32 %s364, 1
          %s1894 = smul.addr %s1893, 16
          %s1895 = scalar_lea.vmem [#allocation22], %s1894
          %1896 = dma.done %s1892, 256
        $region140: #{tpu_custom_call.1} parent=131 // pred_fallthru
          _
      $region132: #{tpu_custom_call.1} parent=5 // pred_fallthru
        _
    $region6: #{tpu_custom_call.1} parent=1 // loop_footer
      %s39 = sadd.s32 1, %s35
    $region7: #{tpu_custom_call.1} parent=1 // loop_footer_branch
      %34 = sbr.rel target = $region3
    $region8: #{tpu_custom_call.1} parent=1 // loop_exit
      _
    %1897 = vsyncpa [#allocation4], 1
    %s1898 = scalar_lea.sflag [#allocation4], 1
    %1899 = vsyncpa %s1898, 1
    %1900 = vsyncpa [#allocation7], 1
    %s1901 = scalar_lea.sflag [#allocation7], 1
    %1902 = vsyncpa %s1901, 1
    %1903 = vsyncpa [#allocation10], 1
    %1904 = vsyncpa [#allocation13], 1
    %1905 = vsyncpa [#allocation16], 1
    %1906 = vsyncpa [#allocation5], 1
    %s1907 = scalar_lea.sflag [#allocation5], 1
    %1908 = vsyncpa %s1907, 1
    %1909 = vsyncpa [#allocation23], 1
    %s1910 = scalar_lea.sflag [#allocation23], 1
    %1911 = vsyncpa %s1910, 1

</llo_original>
